<compile_context>
chip_gen: v6e
topology: v6e:2x2x1
jax: 0.10.0
libtpu: 0.0.40
codegen_flags: <defaults>
</compile_context>

<pallas_src>
import functools
import math

import jax
import jax.numpy as jnp
from jax.experimental import pallas as pl
from jax.experimental.pallas import tpu as pltpu


def _round_up(x, m):
    return ((x + m - 1) // m) * m


# ---------------------------------------------------------------------------
# Kernel A: per-grid-step partial sum-of-squares of y = x_tile @ W_big.
# No resident accumulator -> grid is "parallel" (shards across TCs on v7x).
# ---------------------------------------------------------------------------
def _ssq_kernel(x_ref, w_ref, ssq_ref):
    y = jnp.dot(x_ref[...], w_ref[...], preferred_element_type=jnp.float32)
    ssq_ref[...] = jnp.sum(y * y, axis=0, keepdims=True)[None]


# ---------------------------------------------------------------------------
# Kernel B: y' = x_tile @ (W*scale)  (BN scale pre-folded), + shift, PReLU.
# Skip add is NOT done here (fused into the output transpose in XLA).
# ---------------------------------------------------------------------------
def _fused_kernel(x_ref, w_ref, shift_ref, a_ref, o_ref):
    z = jnp.dot(x_ref[...], w_ref[...], preferred_element_type=jnp.float32)
    z = z + shift_ref[...]
    o_ref[...] = jnp.where(z > 0, z, a_ref[...] * z)


_TILE_VMEM_BUDGET = 20 * 1024 * 1024   # bytes of row tiles (double-buffered)
_VMEM_LIMIT = 32 * 1024 * 1024         # explicit scoped-VMEM limit (safe on all gens)


@functools.partial(jax.jit, static_argnames=("eps", "tile_rows"))
def up_trans_add(x, skip, weight, gamma, beta, prelu_a, eps=1e-5, tile_rows=2048):
    """x: (N, Cin, D, H, W) f32; skip: (N, Cout, 2D, 2H, 2W) f32
    weight: (Cin, Cout, 2, 2, 2) (PyTorch ConvTranspose3d layout)
    gamma/beta/prelu_a: (Cout,)"""
    N, Cin, D, H, W = x.shape
    Cout = weight.shape[1]
    M = N * D * H * W
    C8 = 8 * Cout                        # columns per row: (kd,kh,kw,co)

    # Fold R consecutive rows into the lane dim -> lane-dense last dim (mult of 128).
    R = 128 // math.gcd(C8, 128)
    CL = R * C8
    RCin = R * Cin
    Mg = -(-M // R)                      # ceil(M / R) group-rows

    # --- VMEM-budget-derived row tiles ---------------------------------------
    # TODO(synk): for awkward Cout where w_big itself approaches VMEM, split the
    # matmul per lane group r instead of one dense kron(I_R, W).
    w_bytes = RCin * CL * 4
    avail = max(_TILE_VMEM_BUDGET - 2 * w_bytes, 2 * 1024 * 1024)
    per_row_b = 4 * (RCin + CL)                       # x tile + out tile per row
    max_rows_b = max(8, (avail // (2 * per_row_b)) // 8 * 8)
    tmg_b = max(8, min(_round_up(Mg, 8), _round_up(tile_rows, 8), max_rows_b))
    per_row_a = 4 * RCin                              # kernel A streams only x
    max_rows_a = max(8, (avail // (2 * per_row_a)) // 8 * 8)
    ka = 1
    for k in (8, 4, 2):                               # decoupled, larger A tile
        if k * tmg_b <= min(_round_up(Mg, 8), max_rows_a):
            ka = k
            break
    tmg_a = ka * tmg_b
    Mg_pad = _round_up(Mg, tmg_a)                     # divisible by tmg_a and tmg_b
    M_pad = Mg_pad * R
    grid_a = (Mg_pad // tmg_a,)
    grid_b = (Mg_pad // tmg_b,)

    # --- glue: x -> (group-rows, R*Cin); zero-pad ragged rows (stats-safe) -----
    x_flat = jnp.transpose(x, (0, 2, 3, 4, 1)).reshape(M, Cin)
    if M_pad != M:
        x_flat = jnp.pad(x_flat, ((0, M_pad - M), (0, 0)))
    x2 = x_flat.reshape(Mg_pad, RCin)                 # contiguous reshape (no copy)

    # weight -> (Cin, (kd,kh,kw,co)) -> block-diagonal kron(I_R, W)
    w_mat = jnp.transpose(weight, (0, 2, 3, 4, 1)).reshape(Cin, C8).astype(jnp.float32)
    w_big = jnp.kron(jnp.eye(R, dtype=jnp.float32), w_mat)

    # --- kernel A: partial per-column sum-of-squares (parallel grid) ------------
    ssq_part = pl.pallas_call(
        _ssq_kernel,
        out_shape=jax.ShapeDtypeStruct((grid_a[0], 1, CL), jnp.float32),
        grid=grid_a,
        in_specs=[
            pl.BlockSpec((tmg_a, RCin), lambda i: (i, 0)),
            pl.BlockSpec((RCin, CL), lambda i: (0, 0)),
        ],
        out_specs=pl.BlockSpec((1, 1, CL), lambda i: (i, 0, 0)),
        compiler_params=pltpu.CompilerParams(
            dimension_semantics=("parallel",),
            vmem_limit_bytes=_VMEM_LIMIT,
        ),
    )(x2, w_big)

    # --- BN statistics folded per channel (column l -> channel l % Cout) --------
    # Per-column sum is hoisted out of the kernel: sum_rows(y) == sum_rows(x) @ W.
    # NOTE: var = E[y^2]-E[y]^2 in f32 is cancellation-prone for extreme mean/std
    # ratios; fine at the validated 1e-3 tolerance.
    cnt = jnp.float32(M * 8)                          # true count (pad rows are 0)
    x_csum = jnp.sum(x, axis=(0, 2, 3, 4), dtype=jnp.float32)        # (Cin,)
    sum_c = (x_csum @ w_mat).reshape(8, Cout).sum(axis=0)
    ssq_c = ssq_part.reshape(-1, CL).sum(axis=0).reshape(R * 8, Cout).sum(axis=0)
    mean_c = sum_c / cnt
    var_c = jnp.maximum(ssq_c / cnt - mean_c * mean_c, 0.0)          # biased (BN fwd)
    inv_c = jax.lax.rsqrt(var_c + eps)
    scale_c = gamma.astype(jnp.float32) * inv_c
    shift_c = beta.astype(jnp.float32) - mean_c * scale_c

    reps = CL // Cout
    scale_cols = jnp.tile(scale_c, reps)
    shift_cols = jnp.tile(shift_c, reps).reshape(1, CL)
    a_cols = jnp.tile(prelu_a.astype(jnp.float32), reps).reshape(1, CL)
    w_scaled = w_big * scale_cols[None, :]            # fold BN scale into the weight

    # --- kernel B: convT matmul + BN shift + PReLU (fused) -----------------------
    out2 = pl.pallas_call(
        _fused_kernel,
        out_shape=jax.ShapeDtypeStruct((Mg_pad, CL), jnp.float32),
        grid=grid_b,
        in_specs=[
            pl.BlockSpec((tmg_b, RCin), lambda i: (i, 0)),
            pl.BlockSpec((RCin, CL), lambda i: (0, 0)),
            pl.BlockSpec((1, CL), lambda i: (0, 0)),
            pl.BlockSpec((1, CL), lambda i: (0, 0)),
        ],
        out_specs=pl.BlockSpec((tmg_b, CL), lambda i: (i, 0)),
        compiler_params=pltpu.CompilerParams(
            dimension_semantics=("parallel",),
            vmem_limit_bytes=_VMEM_LIMIT,
        ),
    )(x2, w_scaled, shift_cols, a_cols)

    # TODO(synk): dropout (drop_rate > 0) not implemented; module default drop_rate=0.

    # --- glue: scatter back to NCDHW, skip add fused into this pass --------------
    out_flat = out2.reshape(M_pad, C8)[:M]
    out = (
        out_flat.reshape(N, D, H, W, 2, 2, 2, Cout)
        .transpose(0, 7, 1, 4, 2, 5, 3, 6)
        .reshape(N, Cout, 2 * D, 2 * H, 2 * W)
    ) + skip
    return out


# ---------------------------------------------------------------------------
# Pure-JAX reference (independent path) for a sanity check
# ---------------------------------------------------------------------------
def _reference(x, skip, weight, gamma, beta, prelu_a, eps=1e-5):
    N, Cin, D, H, W = x.shape
    Cout = weight.shape[1]
    out = jnp.zeros((N, Cout, 2 * D, 2 * H, 2 * W), jnp.float32)
    for kd in range(2):
        for kh in range(2):
            for kw in range(2):
                contrib = jnp.einsum("ncdhw,co->nodhw", x, weight[:, :, kd, kh, kw])
                out = out.at[:, :, kd::2, kh::2, kw::2].set(contrib)
    mean = out.mean(axis=(0, 2, 3, 4), keepdims=True)
    var = out.var(axis=(0, 2, 3, 4), keepdims=True)  # biased
    y = (out - mean) / jnp.sqrt(var + eps)
    y = y * gamma.reshape(1, -1, 1, 1, 1) + beta.reshape(1, -1, 1, 1, 1)
    a = prelu_a.reshape(1, -1, 1, 1, 1)
    y = jnp.where(y > 0, y, a * y)
    return y + skip


if __name__ == "__main__":
    key = jax.random.PRNGKey(0)
    k1, k2, k3, k4, k5, k6 = jax.random.split(key, 6)

    N, Cin, Cout, D, H, W = 2, 8, 4, 7, 16, 16

    x = jax.random.normal(k1, (N, Cin, D, H, W), jnp.float32)
    skip = jax.random.normal(k2, (N, Cout, 2 * D, 2 * H, 2 * W), jnp.float32)
    # ConvTranspose3d weight: (in_channels, out_channels, 2, 2, 2)
    weight = jax.random.normal(k3, (Cin, Cout, 2, 2, 2), jnp.float32) * 0.1
    gamma = jnp.ones((Cout,), jnp.float32) + 0.1 * jax.random.normal(k4, (Cout,))
    beta = 0.1 * jax.random.normal(k5, (Cout,), jnp.float32)
    prelu_a = jnp.full((Cout,), 0.25, jnp.float32) + 0.05 * jax.random.normal(k6, (Cout,))

    ref = _reference(x, skip, weight, gamma, beta, prelu_a)

    # Default (large-tile) path: grid collapses to one step at this size.
    out = jax.block_until_ready(up_trans_add(x, skip, weight, gamma, beta, prelu_a))
    assert out.shape == (N, Cout, 2 * D, 2 * H, 2 * W)
    err = float(jnp.max(jnp.abs(out - ref)))
    assert jnp.allclose(out, ref, rtol=1e-3, atol=1e-3), err

    # Small-tile path: exercises multi-step grids, decoupled A/B tiles
    # (tmg_a = 2 * tmg_b) and the ragged zero-padding path (Mg=896 -> 1024).
    out_small = jax.block_until_ready(
        up_trans_add(x, skip, weight, gamma, beta, prelu_a, tile_rows=256)
    )
    err_s = float(jnp.max(jnp.abs(out_small - ref)))
    assert jnp.allclose(out_small, ref, rtol=1e-3, atol=1e-3), err_s

    print("KERNEL_OK")
</pallas_src>

<mosaic_0001>
module attributes {stable_mosaic.version = 11 : i64} {
  func.func @_ssq_kernel(%arg0: i32, %arg1: memref<896x32xf32, #tpu.memory_space<vmem>>, %arg2: memref<32x128xf32, #tpu.memory_space<vmem>>, %arg3: memref<1x1x128xf32, #tpu.memory_space<vmem>>) attributes {dimension_semantics = [#tpu.dimension_semantics<parallel>], iteration_bounds = array<i64: 1>, scalar_prefetch = 0 : i64, scratch_operands = 0 : i64, tpu.core_type = #tpu.core_type<tc>, window_params = [{transform_indices = @transform_0, window_bounds = array<i64: 896, 32>}, {pipeline_mode = #tpu.pipeline_mode<synchronous>, transform_indices = @transform_1, window_bounds = array<i64: 32, 128>}, {transform_indices = @transform_2, window_bounds = array<i64: 1, 1, 128>}]} {
    %c0 = arith.constant 0 : index
    %c0_0 = arith.constant 0 : index
    %0 = vector.load %arg1[%c0, %c0_0] : memref<896x32xf32, #tpu.memory_space<vmem>>, vector<896x32xf32>
    %c0_1 = arith.constant 0 : index
    %c0_2 = arith.constant 0 : index
    %1 = vector.load %arg2[%c0_1, %c0_2] : memref<32x128xf32, #tpu.memory_space<vmem>>, vector<32x128xf32>
    %cst = arith.constant dense<0.000000e+00> : vector<896x128xf32>
    %2 = tpu.matmul %0, %1, %cst {dimension_numbers = #tpu.dot_dimension_numbers<[1], [0], [0], [1], [0, 0, 1, 1], [], []>} : vector<896x32xf32>, vector<32x128xf32>, vector<896x128xf32> -> vector<896x128xf32>
    %3 = arith.mulf %2, %2 : vector<896x128xf32>
    %cst_3 = arith.constant dense<0.000000e+00> : vector<128xf32>
    %4 = vector.multi_reduction <add>, %3, %cst_3 [0] : vector<896x128xf32> to vector<128xf32>
    %5 = vector.shape_cast %4 : vector<128xf32> to vector<1x128xf32>
    %6 = vector.shape_cast %5 : vector<1x128xf32> to vector<1x1x128xf32>
    %c0_4 = arith.constant 0 : index
    %c0_5 = arith.constant 0 : index
    %c0_6 = arith.constant 0 : index
    %7 = vector.load %arg3[%c0_4, %c0_5, %c0_6] : memref<1x1x128xf32, #tpu.memory_space<vmem>>, vector<1x1x128xf32>
    tpu.vector_store %arg3[%c0_4, %c0_5, %c0_6], %6 {strides = array<i32>} : memref<1x1x128xf32, #tpu.memory_space<vmem>>, vector<1x1x128xf32>,
    return
  }
  func.func @transform_0(%arg0: i32) -> (i32, i32) {
    %c0_i32 = arith.constant 0 : i32
    %c0_i32_0 = arith.constant 0 : i32
    return %arg0, %c0_i32 : i32, i32
  }
  func.func @transform_1(%arg0: i32) -> (i32, i32) {
    %c0_i32 = arith.constant 0 : i32
    %c0_i32_0 = arith.constant 0 : i32
    %c0_i32_1 = arith.constant 0 : i32
    return %c0_i32, %c0_i32_0 : i32, i32
  }
  func.func @transform_2(%arg0: i32) -> (i32, i32, i32) {
    %c0_i32 = arith.constant 0 : i32
    %c0_i32_0 = arith.constant 0 : i32
    %c0_i32_1 = arith.constant 0 : i32
    return %arg0, %c0_i32, %c0_i32_0 : i32, i32, i32
  }
}

module attributes {stable_mosaic.version = 11 : i64} {
  func.func @_fused_kernel(%arg0: i32, %arg1: memref<896x32xf32, #tpu.memory_space<vmem>>, %arg2: memref<32x128xf32, #tpu.memory_space<vmem>>, %arg3: memref<1x128xf32, #tpu.memory_space<vmem>>, %arg4: memref<1x128xf32, #tpu.memory_space<vmem>>, %arg5: memref<896x128xf32, #tpu.memory_space<vmem>>) attributes {dimension_semantics = [#tpu.dimension_semantics<parallel>], iteration_bounds = array<i64: 1>, scalar_prefetch = 0 : i64, scratch_operands = 0 : i64, tpu.core_type = #tpu.core_type<tc>, window_params = [{transform_indices = @transform_0, window_bounds = array<i64: 896, 32>}, {pipeline_mode = #tpu.pipeline_mode<synchronous>, transform_indices = @transform_1, window_bounds = array<i64: 32, 128>}, {pipeline_mode = #tpu.pipeline_mode<synchronous>, transform_indices = @transform_2, window_bounds = array<i64: 1, 128>}, {pipeline_mode = #tpu.pipeline_mode<synchronous>, transform_indices = @transform_3, window_bounds = array<i64: 1, 128>}, {transform_indices = @transform_4, window_bounds = array<i64: 896, 128>}]} {
    %c0 = arith.constant 0 : index
    %c0_0 = arith.constant 0 : index
    %0 = vector.load %arg1[%c0, %c0_0] : memref<896x32xf32, #tpu.memory_space<vmem>>, vector<896x32xf32>
    %c0_1 = arith.constant 0 : index
    %c0_2 = arith.constant 0 : index
    %1 = vector.load %arg2[%c0_1, %c0_2] : memref<32x128xf32, #tpu.memory_space<vmem>>, vector<32x128xf32>
    %cst = arith.constant dense<0.000000e+00> : vector<896x128xf32>
    %2 = tpu.matmul %0, %1, %cst {dimension_numbers = #tpu.dot_dimension_numbers<[1], [0], [0], [1], [0, 0, 1, 1], [], []>} : vector<896x32xf32>, vector<32x128xf32>, vector<896x128xf32> -> vector<896x128xf32>
    %c0_3 = arith.constant 0 : index
    %c0_4 = arith.constant 0 : index
    %3 = vector.load %arg3[%c0_3, %c0_4] : memref<1x128xf32, #tpu.memory_space<vmem>>, vector<1x128xf32>
    %4 = vector.broadcast %3 : vector<1x128xf32> to vector<896x128xf32>
    %5 = arith.addf %2, %4 : vector<896x128xf32>
    %cst_5 = arith.constant 0.000000e+00 : f32
    %6 = vector.broadcast %cst_5 : f32 to vector<896x128xf32>
    %7 = arith.cmpf ogt, %5, %6 : vector<896x128xf32>
    %c0_6 = arith.constant 0 : index
    %c0_7 = arith.constant 0 : index
    %8 = vector.load %arg4[%c0_6, %c0_7] : memref<1x128xf32, #tpu.memory_space<vmem>>, vector<1x128xf32>
    %9 = vector.broadcast %8 : vector<1x128xf32> to vector<896x128xf32>
    %10 = arith.mulf %9, %5 : vector<896x128xf32>
    %11 = arith.select %7, %5, %10 : vector<896x128xi1>, vector<896x128xf32>
    %c0_8 = arith.constant 0 : index
    %c0_9 = arith.constant 0 : index
    %12 = vector.load %arg5[%c0_8, %c0_9] : memref<896x128xf32, #tpu.memory_space<vmem>>, vector<896x128xf32>
    tpu.vector_store %arg5[%c0_8, %c0_9], %11 {strides = array<i32>} : memref<896x128xf32, #tpu.memory_space<vmem>>, vector<896x128xf32>,
    return
  }
  func.func @transform_0(%arg0: i32) -> (i32, i32) {
    %c0_i32 = arith.constant 0 : i32
    %c0_i32_0 = arith.constant 0 : i32
    return %arg0, %c0_i32 : i32, i32
  }
  func.func @transform_1(%arg0: i32) -> (i32, i32) {
    %c0_i32 = arith.constant 0 : i32
    %c0_i32_0 = arith.constant 0 : i32
    %c0_i32_1 = arith.constant 0 : i32
    return %c0_i32, %c0_i32_0 : i32, i32
  }
  func.func @transform_2(%arg0: i32) -> (i32, i32) {
    %c0_i32 = arith.constant 0 : i32
    %c0_i32_0 = arith.constant 0 : i32
    %c0_i32_1 = arith.constant 0 : i32
    return %c0_i32, %c0_i32_0 : i32, i32
  }
  func.func @transform_3(%arg0: i32) -> (i32, i32) {
    %c0_i32 = arith.constant 0 : i32
    %c0_i32_0 = arith.constant 0 : i32
    %c0_i32_1 = arith.constant 0 : i32
    return %c0_i32, %c0_i32_0 : i32, i32
  }
  func.func @transform_4(%arg0: i32) -> (i32, i32) {
    %c0_i32 = arith.constant 0 : i32
    %c0_i32_0 = arith.constant 0 : i32
    return %arg0, %c0_i32 : i32, i32
  }
}

</mosaic_0001>

<llo_original>
// kernel: tile.28
$region0: #{tile.28}
  %s0 = inlined_call_operand.vmem [shape: f32[32,4], index: 0, kind: input, shape index: {}]
  %s1 = inlined_call_operand.vmem [shape: f32[1,128], index: 1, kind: output, shape index: {}]
  $region1: #{tile.28} parent=0
    #allocation0 [shape = 'u8[4096]{0}', space=vmem, size = 0x1000, scoped, tag = 'scoped mem for output reshape']
    %v2 = vld [vmem:[%s0] sm:$0x1]
    %vm3 = vcmask 31744
    %4 = vst.msk [vmem:[#allocation0] sm:$0x1] %vm3, %v2
    %s5 = scalar_lea.vmem %s0, 31
    %v6 = vld [vmem:[%s5] sm:$0x1]
    %7 = vrot.lane.b32.xlu0 %v6, 124
    %v8 = vpop.permute.xlu0 %7
    %vm9 = vcmask 1048544
    %10 = vst.msk [vmem:[#allocation0] sm:$0x1] %vm9, %v8
    %s11 = scalar_lea.vmem %s0, 30
    %v12 = vld [vmem:[%s11] sm:$0x1]
    %13 = vrot.lane.b32.xlu0 %v12, 120
    %v14 = vpop.permute.xlu0 %13
    %vm15 = vcmask 1015744
    %16 = vst.msk [vmem:[#allocation0] sm:$0x1] %vm15, %v14
    %s17 = scalar_lea.vmem %s0, 29
    %v18 = vld [vmem:[%s17] sm:$0x1]
    %19 = vrot.lane.b32.xlu0 %v18, 116
    %v20 = vpop.permute.xlu0 %19
    %vm21 = vcmask 982944
    %22 = vst.msk [vmem:[#allocation0] sm:$0x1] %vm21, %v20
    %s23 = scalar_lea.vmem %s0, 28
    %v24 = vld [vmem:[%s23] sm:$0x1]
    %25 = vrot.lane.b32.xlu0 %v24, 112
    %v26 = vpop.permute.xlu0 %25
    %vm27 = vcmask 950144
    %28 = vst.msk [vmem:[#allocation0] sm:$0x1] %vm27, %v26
    %s29 = scalar_lea.vmem %s0, 27
    %v30 = vld [vmem:[%s29] sm:$0x1]
    %31 = vrot.lane.b32.xlu0 %v30, 108
    %v32 = vpop.permute.xlu0 %31
    %vm33 = vcmask 917344
    %34 = vst.msk [vmem:[#allocation0] sm:$0x1] %vm33, %v32
    %s35 = scalar_lea.vmem %s0, 26
    %v36 = vld [vmem:[%s35] sm:$0x1]
    %37 = vrot.lane.b32.xlu0 %v36, 104
    %v38 = vpop.permute.xlu0 %37
    %vm39 = vcmask 884544
    %40 = vst.msk [vmem:[#allocation0] sm:$0x1] %vm39, %v38
    %s41 = scalar_lea.vmem %s0, 25
    %v42 = vld [vmem:[%s41] sm:$0x1]
    %43 = vrot.lane.b32.xlu0 %v42, 100
    %v44 = vpop.permute.xlu0 %43
    %vm45 = vcmask 851744
    %46 = vst.msk [vmem:[#allocation0] sm:$0x1] %vm45, %v44
    %s47 = scalar_lea.vmem %s0, 24
    %v48 = vld [vmem:[%s47] sm:$0x1]
    %49 = vrot.lane.b32.xlu0 %v48, 96
    %v50 = vpop.permute.xlu0 %49
    %vm51 = vcmask 818944
    %52 = vst.msk [vmem:[#allocation0] sm:$0x1] %vm51, %v50
    %s53 = scalar_lea.vmem %s0, 23
    %v54 = vld [vmem:[%s53] sm:$0x1]
    %55 = vrot.lane.b32.xlu0 %v54, 92
    %v56 = vpop.permute.xlu0 %55
    %vm57 = vcmask 786144
    %58 = vst.msk [vmem:[#allocation0] sm:$0x1] %vm57, %v56
    %s59 = scalar_lea.vmem %s0, 22
    %v60 = vld [vmem:[%s59] sm:$0x1]
    %61 = vrot.lane.b32.xlu0 %v60, 88
    %v62 = vpop.permute.xlu0 %61
    %vm63 = vcmask 753344
    %64 = vst.msk [vmem:[#allocation0] sm:$0x1] %vm63, %v62
    %s65 = scalar_lea.vmem %s0, 21
    %v66 = vld [vmem:[%s65] sm:$0x1]
    %67 = vrot.lane.b32.xlu0 %v66, 84
    %v68 = vpop.permute.xlu0 %67
    %vm69 = vcmask 720544
    %70 = vst.msk [vmem:[#allocation0] sm:$0x1] %vm69, %v68
    %s71 = scalar_lea.vmem %s0, 20
    %v72 = vld [vmem:[%s71] sm:$0x1]
    %73 = vrot.lane.b32.xlu0 %v72, 80
    %v74 = vpop.permute.xlu0 %73
    %vm75 = vcmask 687744
    %76 = vst.msk [vmem:[#allocation0] sm:$0x1] %vm75, %v74
    %s77 = scalar_lea.vmem %s0, 19
    %v78 = vld [vmem:[%s77] sm:$0x1]
    %79 = vrot.lane.b32.xlu0 %v78, 76
    %v80 = vpop.permute.xlu0 %79
    %vm81 = vcmask 654944
    %82 = vst.msk [vmem:[#allocation0] sm:$0x1] %vm81, %v80
    %s83 = scalar_lea.vmem %s0, 18
    %v84 = vld [vmem:[%s83] sm:$0x1]
    %85 = vrot.lane.b32.xlu0 %v84, 72
    %v86 = vpop.permute.xlu0 %85
    %vm87 = vcmask 622144
    %88 = vst.msk [vmem:[#allocation0] sm:$0x1] %vm87, %v86
    %s89 = scalar_lea.vmem %s0, 17
    %v90 = vld [vmem:[%s89] sm:$0x1]
    %91 = vrot.lane.b32.xlu0 %v90, 68
    %v92 = vpop.permute.xlu0 %91
    %vm93 = vcmask 589344
    %94 = vst.msk [vmem:[#allocation0] sm:$0x1] %vm93, %v92
    %s95 = scalar_lea.vmem %s0, 16
    %v96 = vld [vmem:[%s95] sm:$0x1]
    %97 = vrot.lane.b32.xlu0 %v96, 64
    %v98 = vpop.permute.xlu0 %97
    %vm99 = vcmask 556544
    %100 = vst.msk [vmem:[#allocation0] sm:$0x1] %vm99, %v98
    %s101 = scalar_lea.vmem %s0, 15
    %v102 = vld [vmem:[%s101] sm:$0x1]
    %103 = vrot.lane.b32.xlu0 %v102, 60
    %v104 = vpop.permute.xlu0 %103
    %vm105 = vcmask 523744
    %106 = vst.msk [vmem:[#allocation0] sm:$0x1] %vm105, %v104
    %s107 = scalar_lea.vmem %s0, 14
    %v108 = vld [vmem:[%s107] sm:$0x1]
    %109 = vrot.lane.b32.xlu0 %v108, 56
    %v110 = vpop.permute.xlu0 %109
    %vm111 = vcmask 490944
    %112 = vst.msk [vmem:[#allocation0] sm:$0x1] %vm111, %v110
    %s113 = scalar_lea.vmem %s0, 13
    %v114 = vld [vmem:[%s113] sm:$0x1]
    %115 = vrot.lane.b32.xlu0 %v114, 52
    %v116 = vpop.permute.xlu0 %115
    %vm117 = vcmask 458144
    %118 = vst.msk [vmem:[#allocation0] sm:$0x1] %vm117, %v116
    %s119 = scalar_lea.vmem %s0, 12
    %v120 = vld [vmem:[%s119] sm:$0x1]
    %121 = vrot.lane.b32.xlu0 %v120, 48
    %v122 = vpop.permute.xlu0 %121
    %vm123 = vcmask 425344
    %124 = vst.msk [vmem:[#allocation0] sm:$0x1] %vm123, %v122
    %s125 = scalar_lea.vmem %s0, 11
    %v126 = vld [vmem:[%s125] sm:$0x1]
    %127 = vrot.lane.b32.xlu0 %v126, 44
    %v128 = vpop.permute.xlu0 %127
    %vm129 = vcmask 392544
    %130 = vst.msk [vmem:[#allocation0] sm:$0x1] %vm129, %v128
    %s131 = scalar_lea.vmem %s0, 10
    %v132 = vld [vmem:[%s131] sm:$0x1]
    %133 = vrot.lane.b32.xlu0 %v132, 40
    %v134 = vpop.permute.xlu0 %133
    %vm135 = vcmask 359744
    %136 = vst.msk [vmem:[#allocation0] sm:$0x1] %vm135, %v134
    %s137 = scalar_lea.vmem %s0, 9
    %v138 = vld [vmem:[%s137] sm:$0x1]
    %139 = vrot.lane.b32.xlu0 %v138, 36
    %v140 = vpop.permute.xlu0 %139
    %vm141 = vcmask 326944
    %142 = vst.msk [vmem:[#allocation0] sm:$0x1] %vm141, %v140
    %s143 = scalar_lea.vmem %s0, 8
    %v144 = vld [vmem:[%s143] sm:$0x1]
    %145 = vrot.lane.b32.xlu0 %v144, 32
    %v146 = vpop.permute.xlu0 %145
    %vm147 = vcmask 294144
    %148 = vst.msk [vmem:[#allocation0] sm:$0x1] %vm147, %v146
    %s149 = scalar_lea.vmem %s0, 7
    %v150 = vld [vmem:[%s149] sm:$0x1]
    %151 = vrot.lane.b32.xlu0 %v150, 28
    %v152 = vpop.permute.xlu0 %151
    %vm153 = vcmask 261344
    %154 = vst.msk [vmem:[#allocation0] sm:$0x1] %vm153, %v152
    %s155 = scalar_lea.vmem %s0, 6
    %v156 = vld [vmem:[%s155] sm:$0x1]
    %157 = vrot.lane.b32.xlu0 %v156, 24
    %v158 = vpop.permute.xlu0 %157
    %vm159 = vcmask 228544
    %160 = vst.msk [vmem:[#allocation0] sm:$0x1] %vm159, %v158
    %s161 = scalar_lea.vmem %s0, 5
    %v162 = vld [vmem:[%s161] sm:$0x1]
    %163 = vrot.lane.b32.xlu0 %v162, 20
    %v164 = vpop.permute.xlu0 %163
    %vm165 = vcmask 195744
    %166 = vst.msk [vmem:[#allocation0] sm:$0x1] %vm165, %v164
    %s167 = scalar_lea.vmem %s0, 4
    %v168 = vld [vmem:[%s167] sm:$0x1]
    %169 = vrot.lane.b32.xlu0 %v168, 16
    %v170 = vpop.permute.xlu0 %169
    %vm171 = vcmask 162944
    %172 = vst.msk [vmem:[#allocation0] sm:$0x1] %vm171, %v170
    %s173 = scalar_lea.vmem %s0, 3
    %v174 = vld [vmem:[%s173] sm:$0x1]
    %175 = vrot.lane.b32.xlu0 %v174, 12
    %v176 = vpop.permute.xlu0 %175
    %vm177 = vcmask 130144
    %178 = vst.msk [vmem:[#allocation0] sm:$0x1] %vm177, %v176
    %s179 = scalar_lea.vmem %s0, 2
    %v180 = vld [vmem:[%s179] sm:$0x1]
    %181 = vrot.lane.b32.xlu0 %v180, 8
    %v182 = vpop.permute.xlu0 %181
    %vm183 = vcmask 97344
    %184 = vst.msk [vmem:[#allocation0] sm:$0x1] %vm183, %v182
    %s185 = scalar_lea.vmem %s0, 1
    %v186 = vld [vmem:[%s185] sm:$0x1]
    %187 = vrot.lane.b32.xlu0 %v186, 4
    %v188 = vpop.permute.xlu0 %187
    %vm189 = vcmask 64544
    %190 = vst.msk [vmem:[#allocation0] sm:$0x1] %vm189, %v188
    %s192 = sshll.u32 1, 1
    %s193 = ssub.s32 %s192, 1
    %v195 = vld [vmem:[#allocation0] sm:%s193]
    %s196 = sshll.u32 1, 1
    %s197 = ssub.s32 %s196, 1
    %198 = vst [vmem:[%s1] sm:%s197] %v195

// kernel: tile.27
$region0: #{tile.27}
  #allocation2 [shape = 's32[1]{0}', space=sflag, size = 0x4, scoped, tag = 'scoped memory for tile.27']
  %s0 = inlined_call_operand.hbm [shape: f32[4], index: 0, kind: input, shape index: {}]
  %s1 = inlined_call_operand.vmem [shape: f32[32,4], index: 1, kind: output, shape index: {}]
  $region1: #{tile.27} parent=0
    #allocation0 [shape = 'u8[512]{0}', space=vmem, size = 0x400, scoped, tag = 'operand span for operand 0']
    #allocation1 [shape = 's32[1]{0}', space=sflag, size = 0x4, scoped, tag = 'scoped memory for tile.27']
    %2 = vsyncpa [#allocation1], 0
    // Predicated region
    $region2: #{tile.27} parent=1 // pred_check
      _
    $region3: #{tile.27} parent=1 // pred_check_branch
      %4 = sbr.rel (0) target = $region5
    $region4: #{tile.27} parent=1 // pred_region
      %s6 = ssub.s32 16, 16
      %7 = vsyncadd [#allocation1], %s6
      %s9 = sshll.u32 [#allocation0], 4
      %s10 = int_to_ptr.vmem [resolvable:$true] %s9
      %12 = dma.hbm_to_vmem [thread:$0]  %s0, 16, %s10, [#allocation1]
    $region5: #{tile.27} parent=1 // pred_fallthru
      _
    // Predicated region
    $region6: #{tile.27} parent=1 // pred_check
      _
    $region7: #{tile.27} parent=1 // pred_check_branch
      %14 = sbr.rel (0) target = $region9
    $region8: #{tile.27} parent=1 // pred_region
      %15 = dma.done [#allocation1], 16
    $region9: #{tile.27} parent=1 // pred_fallthru
      _
    %v16 = vld [vmem:[#allocation0] ss:$0 sm:$0xff]
    %17 = vst [vmem:[%s1] sm:$0xff] %v16
    %s18 = scalar_lea.vmem %s1, 8
    %19 = vst [vmem:[%s18] sm:$0xff] %v16
    %s20 = scalar_lea.vmem %s1, 16
    %21 = vst [vmem:[%s20] sm:$0xff] %v16
    %s22 = scalar_lea.vmem %s1, 24
    %23 = vst [vmem:[%s22] sm:$0xff] %v16
    %24 = vsyncpa [#allocation1], 1

// kernel: tile.22
$region0: #{tile.22}
  #allocation0 [shape = 's32[1]{0}', space=sflag, size = 0x4, scoped, tag = 'scoped memory for tile.22']
  %s0 = inlined_call_operand.vmem [shape: f32[4], index: 0, kind: input, shape index: {}]
  %s1 = inlined_call_operand.vmem [shape: f32[32,4], index: 1, kind: output, shape index: {}]
  // Predicated region
  $region2: #{tile.22} parent=0 // pred_check
    _
  $region3: #{tile.22} parent=0 // pred_check_branch
    %3 = sbr.rel (0) target = $region5
  $region4: #{tile.22} parent=0 // pred_region
    _
  $region5: #{tile.22} parent=0 // pred_fallthru
    _
  %v4 = vld [vmem:[%s0] ss:$0 sm:$0xff]
  %5 = vst [vmem:[%s1] sm:$0xff] %v4
  %s6 = scalar_lea.vmem %s1, 8
  %7 = vst [vmem:[%s6] sm:$0xff] %v4
  %s8 = scalar_lea.vmem %s1, 16
  %9 = vst [vmem:[%s8] sm:$0xff] %v4
  %s10 = scalar_lea.vmem %s1, 24
  %11 = vst [vmem:[%s10] sm:$0xff] %v4

// kernel: mul.25
$region0: #{mul.25}
  %s0 = inlined_call_operand.vmem [shape: f32[32,4], index: 0, kind: input, shape index: {}]
  %s1 = inlined_call_operand.vmem [shape: f32[128], index: 1, kind: output, shape index: {}]
  $region1: #{mul.25} parent=0
    #allocation0 [shape = 'u8[4096]{0}', space=vmem, size = 0x1000, scoped, tag = 'scoped mem for output reshape']
    %v2 = vld [vmem:[%s0] sm:$0x1]
    %vm3 = vcmask 31744
    %4 = vst.msk [vmem:[#allocation0] sm:$0x1] %vm3, %v2
    %s5 = scalar_lea.vmem %s0, 31
    %v6 = vld [vmem:[%s5] sm:$0x1]
    %7 = vrot.lane.b32.xlu0 %v6, 124
    %v8 = vpop.permute.xlu0 %7
    %vm9 = vcmask 1048544
    %10 = vst.msk [vmem:[#allocation0] sm:$0x1] %vm9, %v8
    %s11 = scalar_lea.vmem %s0, 30
    %v12 = vld [vmem:[%s11] sm:$0x1]
    %13 = vrot.lane.b32.xlu0 %v12, 120
    %v14 = vpop.permute.xlu0 %13
    %vm15 = vcmask 1015744
    %16 = vst.msk [vmem:[#allocation0] sm:$0x1] %vm15, %v14
    %s17 = scalar_lea.vmem %s0, 29
    %v18 = vld [vmem:[%s17] sm:$0x1]
    %19 = vrot.lane.b32.xlu0 %v18, 116
    %v20 = vpop.permute.xlu0 %19
    %vm21 = vcmask 982944
    %22 = vst.msk [vmem:[#allocation0] sm:$0x1] %vm21, %v20
    %s23 = scalar_lea.vmem %s0, 28
    %v24 = vld [vmem:[%s23] sm:$0x1]
    %25 = vrot.lane.b32.xlu0 %v24, 112
    %v26 = vpop.permute.xlu0 %25
    %vm27 = vcmask 950144
    %28 = vst.msk [vmem:[#allocation0] sm:$0x1] %vm27, %v26
    %s29 = scalar_lea.vmem %s0, 27
    %v30 = vld [vmem:[%s29] sm:$0x1]
    %31 = vrot.lane.b32.xlu0 %v30, 108
    %v32 = vpop.permute.xlu0 %31
    %vm33 = vcmask 917344
    %34 = vst.msk [vmem:[#allocation0] sm:$0x1] %vm33, %v32
    %s35 = scalar_lea.vmem %s0, 26
    %v36 = vld [vmem:[%s35] sm:$0x1]
    %37 = vrot.lane.b32.xlu0 %v36, 104
    %v38 = vpop.permute.xlu0 %37
    %vm39 = vcmask 884544
    %40 = vst.msk [vmem:[#allocation0] sm:$0x1] %vm39, %v38
    %s41 = scalar_lea.vmem %s0, 25
    %v42 = vld [vmem:[%s41] sm:$0x1]
    %43 = vrot.lane.b32.xlu0 %v42, 100
    %v44 = vpop.permute.xlu0 %43
    %vm45 = vcmask 851744
    %46 = vst.msk [vmem:[#allocation0] sm:$0x1] %vm45, %v44
    %s47 = scalar_lea.vmem %s0, 24
    %v48 = vld [vmem:[%s47] sm:$0x1]
    %49 = vrot.lane.b32.xlu0 %v48, 96
    %v50 = vpop.permute.xlu0 %49
    %vm51 = vcmask 818944
    %52 = vst.msk [vmem:[#allocation0] sm:$0x1] %vm51, %v50
    %s53 = scalar_lea.vmem %s0, 23
    %v54 = vld [vmem:[%s53] sm:$0x1]
    %55 = vrot.lane.b32.xlu0 %v54, 92
    %v56 = vpop.permute.xlu0 %55
    %vm57 = vcmask 786144
    %58 = vst.msk [vmem:[#allocation0] sm:$0x1] %vm57, %v56
    %s59 = scalar_lea.vmem %s0, 22
    %v60 = vld [vmem:[%s59] sm:$0x1]
    %61 = vrot.lane.b32.xlu0 %v60, 88
    %v62 = vpop.permute.xlu0 %61
    %vm63 = vcmask 753344
    %64 = vst.msk [vmem:[#allocation0] sm:$0x1] %vm63, %v62
    %s65 = scalar_lea.vmem %s0, 21
    %v66 = vld [vmem:[%s65] sm:$0x1]
    %67 = vrot.lane.b32.xlu0 %v66, 84
    %v68 = vpop.permute.xlu0 %67
    %vm69 = vcmask 720544
    %70 = vst.msk [vmem:[#allocation0] sm:$0x1] %vm69, %v68
    %s71 = scalar_lea.vmem %s0, 20
    %v72 = vld [vmem:[%s71] sm:$0x1]
    %73 = vrot.lane.b32.xlu0 %v72, 80
    %v74 = vpop.permute.xlu0 %73
    %vm75 = vcmask 687744
    %76 = vst.msk [vmem:[#allocation0] sm:$0x1] %vm75, %v74
    %s77 = scalar_lea.vmem %s0, 19
    %v78 = vld [vmem:[%s77] sm:$0x1]
    %79 = vrot.lane.b32.xlu0 %v78, 76
    %v80 = vpop.permute.xlu0 %79
    %vm81 = vcmask 654944
    %82 = vst.msk [vmem:[#allocation0] sm:$0x1] %vm81, %v80
    %s83 = scalar_lea.vmem %s0, 18
    %v84 = vld [vmem:[%s83] sm:$0x1]
    %85 = vrot.lane.b32.xlu0 %v84, 72
    %v86 = vpop.permute.xlu0 %85
    %vm87 = vcmask 622144
    %88 = vst.msk [vmem:[#allocation0] sm:$0x1] %vm87, %v86
    %s89 = scalar_lea.vmem %s0, 17
    %v90 = vld [vmem:[%s89] sm:$0x1]
    %91 = vrot.lane.b32.xlu0 %v90, 68
    %v92 = vpop.permute.xlu0 %91
    %vm93 = vcmask 589344
    %94 = vst.msk [vmem:[#allocation0] sm:$0x1] %vm93, %v92
    %s95 = scalar_lea.vmem %s0, 16
    %v96 = vld [vmem:[%s95] sm:$0x1]
    %97 = vrot.lane.b32.xlu0 %v96, 64
    %v98 = vpop.permute.xlu0 %97
    %vm99 = vcmask 556544
    %100 = vst.msk [vmem:[#allocation0] sm:$0x1] %vm99, %v98
    %s101 = scalar_lea.vmem %s0, 15
    %v102 = vld [vmem:[%s101] sm:$0x1]
    %103 = vrot.lane.b32.xlu0 %v102, 60
    %v104 = vpop.permute.xlu0 %103
    %vm105 = vcmask 523744
    %106 = vst.msk [vmem:[#allocation0] sm:$0x1] %vm105, %v104
    %s107 = scalar_lea.vmem %s0, 14
    %v108 = vld [vmem:[%s107] sm:$0x1]
    %109 = vrot.lane.b32.xlu0 %v108, 56
    %v110 = vpop.permute.xlu0 %109
    %vm111 = vcmask 490944
    %112 = vst.msk [vmem:[#allocation0] sm:$0x1] %vm111, %v110
    %s113 = scalar_lea.vmem %s0, 13
    %v114 = vld [vmem:[%s113] sm:$0x1]
    %115 = vrot.lane.b32.xlu0 %v114, 52
    %v116 = vpop.permute.xlu0 %115
    %vm117 = vcmask 458144
    %118 = vst.msk [vmem:[#allocation0] sm:$0x1] %vm117, %v116
    %s119 = scalar_lea.vmem %s0, 12
    %v120 = vld [vmem:[%s119] sm:$0x1]
    %121 = vrot.lane.b32.xlu0 %v120, 48
    %v122 = vpop.permute.xlu0 %121
    %vm123 = vcmask 425344
    %124 = vst.msk [vmem:[#allocation0] sm:$0x1] %vm123, %v122
    %s125 = scalar_lea.vmem %s0, 11
    %v126 = vld [vmem:[%s125] sm:$0x1]
    %127 = vrot.lane.b32.xlu0 %v126, 44
    %v128 = vpop.permute.xlu0 %127
    %vm129 = vcmask 392544
    %130 = vst.msk [vmem:[#allocation0] sm:$0x1] %vm129, %v128
    %s131 = scalar_lea.vmem %s0, 10
    %v132 = vld [vmem:[%s131] sm:$0x1]
    %133 = vrot.lane.b32.xlu0 %v132, 40
    %v134 = vpop.permute.xlu0 %133
    %vm135 = vcmask 359744
    %136 = vst.msk [vmem:[#allocation0] sm:$0x1] %vm135, %v134
    %s137 = scalar_lea.vmem %s0, 9
    %v138 = vld [vmem:[%s137] sm:$0x1]
    %139 = vrot.lane.b32.xlu0 %v138, 36
    %v140 = vpop.permute.xlu0 %139
    %vm141 = vcmask 326944
    %142 = vst.msk [vmem:[#allocation0] sm:$0x1] %vm141, %v140
    %s143 = scalar_lea.vmem %s0, 8
    %v144 = vld [vmem:[%s143] sm:$0x1]
    %145 = vrot.lane.b32.xlu0 %v144, 32
    %v146 = vpop.permute.xlu0 %145
    %vm147 = vcmask 294144
    %148 = vst.msk [vmem:[#allocation0] sm:$0x1] %vm147, %v146
    %s149 = scalar_lea.vmem %s0, 7
    %v150 = vld [vmem:[%s149] sm:$0x1]
    %151 = vrot.lane.b32.xlu0 %v150, 28
    %v152 = vpop.permute.xlu0 %151
    %vm153 = vcmask 261344
    %154 = vst.msk [vmem:[#allocation0] sm:$0x1] %vm153, %v152
    %s155 = scalar_lea.vmem %s0, 6
    %v156 = vld [vmem:[%s155] sm:$0x1]
    %157 = vrot.lane.b32.xlu0 %v156, 24
    %v158 = vpop.permute.xlu0 %157
    %vm159 = vcmask 228544
    %160 = vst.msk [vmem:[#allocation0] sm:$0x1] %vm159, %v158
    %s161 = scalar_lea.vmem %s0, 5
    %v162 = vld [vmem:[%s161] sm:$0x1]
    %163 = vrot.lane.b32.xlu0 %v162, 20
    %v164 = vpop.permute.xlu0 %163
    %vm165 = vcmask 195744
    %166 = vst.msk [vmem:[#allocation0] sm:$0x1] %vm165, %v164
    %s167 = scalar_lea.vmem %s0, 4
    %v168 = vld [vmem:[%s167] sm:$0x1]
    %169 = vrot.lane.b32.xlu0 %v168, 16
    %v170 = vpop.permute.xlu0 %169
    %vm171 = vcmask 162944
    %172 = vst.msk [vmem:[#allocation0] sm:$0x1] %vm171, %v170
    %s173 = scalar_lea.vmem %s0, 3
    %v174 = vld [vmem:[%s173] sm:$0x1]
    %175 = vrot.lane.b32.xlu0 %v174, 12
    %v176 = vpop.permute.xlu0 %175
    %vm177 = vcmask 130144
    %178 = vst.msk [vmem:[#allocation0] sm:$0x1] %vm177, %v176
    %s179 = scalar_lea.vmem %s0, 2
    %v180 = vld [vmem:[%s179] sm:$0x1]
    %181 = vrot.lane.b32.xlu0 %v180, 8
    %v182 = vpop.permute.xlu0 %181
    %vm183 = vcmask 97344
    %184 = vst.msk [vmem:[#allocation0] sm:$0x1] %vm183, %v182
    %s185 = scalar_lea.vmem %s0, 1
    %v186 = vld [vmem:[%s185] sm:$0x1]
    %187 = vrot.lane.b32.xlu0 %v186, 4
    %v188 = vpop.permute.xlu0 %187
    %vm189 = vcmask 64544
    %190 = vst.msk [vmem:[#allocation0] sm:$0x1] %vm189, %v188
    %s192 = sshll.u32 1, 1
    %s193 = ssub.s32 %s192, 1
    %v195 = vld [vmem:[#allocation0] sm:%s193]
    %s196 = sshll.u32 1, 1
    %s197 = ssub.s32 %s196, 1
    %198 = vst [vmem:[%s1] sm:%s197] %v195

// kernel: up_trans_add.2
$region0: #{up_trans_add.2}
  #allocation0 [shape = 'u32[]', space=smem, size = 0x4, offset = 0x4, fixed_abs, tag = 'smem constant byte address 0x4 - core index']
  #allocation1 [shape = 'u32[144,128]{1,0:T(1,128)}', space=vmem, size = 0x12000, scoped, tag = 'internal scratch']
  %s0 = inlined_call_operand.vmem [shape: f32[896,32], index: 0, kind: input, shape index: {}]
  %s1 = inlined_call_operand.vmem [shape: f32[32,128], index: 1, kind: input, shape index: {}]
  %s2 = inlined_call_operand.vmem [shape: f32[1,1,128], index: 2, kind: output, shape index: {}]
  %s3 = sld [smem:[#allocation0]]
  $region18: #{up_trans_add.2} parent=0
    _
  %s5 = ssub.s32 1, %s3
  %s6 = scalar_select 0, %s5, %s3
  // Predicated region
  $region2: #{up_trans_add.2} parent=0 // pred_check
    _
  $region3: #{up_trans_add.2} parent=0 // pred_check_branch
    %8 = sbr.rel (0) target = $region5
  $region4: #{up_trans_add.2} parent=0 // pred_region
    _
  $region5: #{up_trans_add.2} parent=0 // pred_fallthru
    _
  // Predicated region
  $region6: #{up_trans_add.2} parent=0 // pred_check
    _
  $region7: #{up_trans_add.2} parent=0 // pred_check_branch
    %10 = sbr.rel (0) target = $region9
  $region8: #{up_trans_add.2} parent=0 // pred_region
    _
  $region9: #{up_trans_add.2} parent=0 // pred_fallthru
    _
  %v11 = vld [vmem:[%s0] sm:$0xff]
  %v12 = vld [vmem:[%s0 + $0x8] sm:$0xff]
  %v13 = vld [vmem:[%s0 + $0x10] sm:$0xff]
  %v14 = vld [vmem:[%s0 + $0x18] sm:$0xff]
  %v15 = vld [vmem:[%s0 + $0x20] sm:$0xff]
  %v16 = vld [vmem:[%s0 + $0x28] sm:$0xff]
  %v17 = vld [vmem:[%s0 + $0x30] sm:$0xff]
  %v18 = vld [vmem:[%s0 + $0x38] sm:$0xff]
  %v19 = vld [vmem:[%s0 + $0x40] sm:$0xff]
  %v20 = vld [vmem:[%s0 + $0x48] sm:$0xff]
  %v21 = vld [vmem:[%s0 + $0x50] sm:$0xff]
  %v22 = vld [vmem:[%s0 + $0x58] sm:$0xff]
  %v23 = vld [vmem:[%s0 + $0x60] sm:$0xff]
  %v24 = vld [vmem:[%s0 + $0x68] sm:$0xff]
  %v25 = vld [vmem:[%s0 + $0x70] sm:$0xff]
  %v26 = vld [vmem:[%s0 + $0x78] sm:$0xff]
  %v27 = vld [vmem:[%s0 + $0x80] sm:$0xff]
  %v28 = vld [vmem:[%s0 + $0x88] sm:$0xff]
  %v29 = vld [vmem:[%s0 + $0x90] sm:$0xff]
  %v30 = vld [vmem:[%s0 + $0x98] sm:$0xff]
  %v31 = vld [vmem:[%s0 + $0xa0] sm:$0xff]
  %v32 = vld [vmem:[%s0 + $0xa8] sm:$0xff]
  %v33 = vld [vmem:[%s0 + $0xb0] sm:$0xff]
  %v34 = vld [vmem:[%s0 + $0xb8] sm:$0xff]
  %v35 = vld [vmem:[%s0 + $0xc0] sm:$0xff]
  %v36 = vld [vmem:[%s0 + $0xc8] sm:$0xff]
  %v37 = vld [vmem:[%s0 + $0xd0] sm:$0xff]
  %v38 = vld [vmem:[%s0 + $0xd8] sm:$0xff]
  %v39 = vld [vmem:[%s0 + $0xe0] sm:$0xff]
  %v40 = vld [vmem:[%s0 + $0xe8] sm:$0xff]
  %v41 = vld [vmem:[%s0 + $0xf0] sm:$0xff]
  %v42 = vld [vmem:[%s0 + $0xf8] sm:$0xff]
  %v43 = vld [vmem:[%s0 + $0x100] sm:$0xff]
  %v44 = vld [vmem:[%s0 + $0x108] sm:$0xff]
  %v45 = vld [vmem:[%s0 + $0x110] sm:$0xff]
  %v46 = vld [vmem:[%s0 + $0x118] sm:$0xff]
  %v47 = vld [vmem:[%s0 + $0x120] sm:$0xff]
  %v48 = vld [vmem:[%s0 + $0x128] sm:$0xff]
  %v49 = vld [vmem:[%s0 + $0x130] sm:$0xff]
  %v50 = vld [vmem:[%s0 + $0x138] sm:$0xff]
  %v51 = vld [vmem:[%s0 + $0x140] sm:$0xff]
  %v52 = vld [vmem:[%s0 + $0x148] sm:$0xff]
  %v53 = vld [vmem:[%s0 + $0x150] sm:$0xff]
  %v54 = vld [vmem:[%s0 + $0x158] sm:$0xff]
  %v55 = vld [vmem:[%s0 + $0x160] sm:$0xff]
  %v56 = vld [vmem:[%s0 + $0x168] sm:$0xff]
  %v57 = vld [vmem:[%s0 + $0x170] sm:$0xff]
  %v58 = vld [vmem:[%s0 + $0x178] sm:$0xff]
  %v59 = vld [vmem:[%s0 + $0x180] sm:$0xff]
  %v60 = vld [vmem:[%s0 + $0x188] sm:$0xff]
  %v61 = vld [vmem:[%s0 + $0x190] sm:$0xff]
  %v62 = vld [vmem:[%s0 + $0x198] sm:$0xff]
  %v63 = vld [vmem:[%s0 + $0x1a0] sm:$0xff]
  %v64 = vld [vmem:[%s0 + $0x1a8] sm:$0xff]
  %v65 = vld [vmem:[%s0 + $0x1b0] sm:$0xff]
  %v66 = vld [vmem:[%s0 + $0x1b8] sm:$0xff]
  %v67 = vld [vmem:[%s0 + $0x1c0] sm:$0xff]
  %v68 = vld [vmem:[%s0 + $0x1c8] sm:$0xff]
  %v69 = vld [vmem:[%s0 + $0x1d0] sm:$0xff]
  %v70 = vld [vmem:[%s0 + $0x1d8] sm:$0xff]
  %v71 = vld [vmem:[%s0 + $0x1e0] sm:$0xff]
  %v72 = vld [vmem:[%s0 + $0x1e8] sm:$0xff]
  %v73 = vld [vmem:[%s0 + $0x1f0] sm:$0xff]
  %v74 = vld [vmem:[%s0 + $0x1f8] sm:$0xff]
  %v75 = vld [vmem:[%s0 + $0x200] sm:$0xff]
  %v76 = vld [vmem:[%s0 + $0x208] sm:$0xff]
  %v77 = vld [vmem:[%s0 + $0x210] sm:$0xff]
  %v78 = vld [vmem:[%s0 + $0x218] sm:$0xff]
  %v79 = vld [vmem:[%s0 + $0x220] sm:$0xff]
  %v80 = vld [vmem:[%s0 + $0x228] sm:$0xff]
  %v81 = vld [vmem:[%s0 + $0x230] sm:$0xff]
  %v82 = vld [vmem:[%s0 + $0x238] sm:$0xff]
  %v83 = vld [vmem:[%s0 + $0x240] sm:$0xff]
  %v84 = vld [vmem:[%s0 + $0x248] sm:$0xff]
  %v85 = vld [vmem:[%s0 + $0x250] sm:$0xff]
  %v86 = vld [vmem:[%s0 + $0x258] sm:$0xff]
  %v87 = vld [vmem:[%s0 + $0x260] sm:$0xff]
  %v88 = vld [vmem:[%s0 + $0x268] sm:$0xff]
  %v89 = vld [vmem:[%s0 + $0x270] sm:$0xff]
  %v90 = vld [vmem:[%s0 + $0x278] sm:$0xff]
  %v91 = vld [vmem:[%s0 + $0x280] sm:$0xff]
  %v92 = vld [vmem:[%s0 + $0x288] sm:$0xff]
  %v93 = vld [vmem:[%s0 + $0x290] sm:$0xff]
  %v94 = vld [vmem:[%s0 + $0x298] sm:$0xff]
  %v95 = vld [vmem:[%s0 + $0x2a0] sm:$0xff]
  %v96 = vld [vmem:[%s0 + $0x2a8] sm:$0xff]
  %v97 = vld [vmem:[%s0 + $0x2b0] sm:$0xff]
  %v98 = vld [vmem:[%s0 + $0x2b8] sm:$0xff]
  %v99 = vld [vmem:[%s0 + $0x2c0] sm:$0xff]
  %v100 = vld [vmem:[%s0 + $0x2c8] sm:$0xff]
  %v101 = vld [vmem:[%s0 + $0x2d0] sm:$0xff]
  %v102 = vld [vmem:[%s0 + $0x2d8] sm:$0xff]
  %v103 = vld [vmem:[%s0 + $0x2e0] sm:$0xff]
  %v104 = vld [vmem:[%s0 + $0x2e8] sm:$0xff]
  %v105 = vld [vmem:[%s0 + $0x2f0] sm:$0xff]
  %v106 = vld [vmem:[%s0 + $0x2f8] sm:$0xff]
  %v107 = vld [vmem:[%s0 + $0x300] sm:$0xff]
  %v108 = vld [vmem:[%s0 + $0x308] sm:$0xff]
  %v109 = vld [vmem:[%s0 + $0x310] sm:$0xff]
  %v110 = vld [vmem:[%s0 + $0x318] sm:$0xff]
  %v111 = vld [vmem:[%s0 + $0x320] sm:$0xff]
  %v112 = vld [vmem:[%s0 + $0x328] sm:$0xff]
  %v113 = vld [vmem:[%s0 + $0x330] sm:$0xff]
  %v114 = vld [vmem:[%s0 + $0x338] sm:$0xff]
  %v115 = vld [vmem:[%s0 + $0x340] sm:$0xff]
  %v116 = vld [vmem:[%s0 + $0x348] sm:$0xff]
  %v117 = vld [vmem:[%s0 + $0x350] sm:$0xff]
  %v118 = vld [vmem:[%s0 + $0x358] sm:$0xff]
  %v119 = vld [vmem:[%s0 + $0x360] sm:$0xff]
  %v120 = vld [vmem:[%s0 + $0x368] sm:$0xff]
  %v121 = vld [vmem:[%s0 + $0x370] sm:$0xff]
  %v122 = vld [vmem:[%s0 + $0x378] sm:$0xff]
  %v123 = vld [vmem:[%s1] sm:$0xff]
  %v124 = vld [vmem:[%s1 + $0x8] sm:$0xff]
  %v125 = vld [vmem:[%s1 + $0x10] sm:$0xff]
  %v126 = vld [vmem:[%s1 + $0x18] sm:$0xff]
  %vm127 = vcmask 261120
  %v129 = vsel %vm127, %v11, 0
  %v132 = vsel %vm127, %v12, 0
  %v135 = vsel %vm127, %v13, 0
  %v138 = vsel %vm127, %v14, 0
  %v141 = vsel %vm127, %v15, 0
  %v144 = vsel %vm127, %v16, 0
  %v147 = vsel %vm127, %v17, 0
  %v150 = vsel %vm127, %v18, 0
  %v153 = vsel %vm127, %v19, 0
  %v156 = vsel %vm127, %v20, 0
  %v159 = vsel %vm127, %v21, 0
  %v162 = vsel %vm127, %v22, 0
  %v165 = vsel %vm127, %v23, 0
  %v168 = vsel %vm127, %v24, 0
  %v171 = vsel %vm127, %v25, 0
  %v174 = vsel %vm127, %v26, 0
  %v177 = vsel %vm127, %v27, 0
  %v180 = vsel %vm127, %v28, 0
  %v183 = vsel %vm127, %v29, 0
  %v186 = vsel %vm127, %v30, 0
  %v189 = vsel %vm127, %v31, 0
  %v192 = vsel %vm127, %v32, 0
  %v195 = vsel %vm127, %v33, 0
  %v198 = vsel %vm127, %v34, 0
  %v201 = vsel %vm127, %v35, 0
  %v204 = vsel %vm127, %v36, 0
  %v207 = vsel %vm127, %v37, 0
  %v210 = vsel %vm127, %v38, 0
  %v213 = vsel %vm127, %v39, 0
  %v216 = vsel %vm127, %v40, 0
  %v219 = vsel %vm127, %v41, 0
  %v222 = vsel %vm127, %v42, 0
  %v225 = vsel %vm127, %v43, 0
  %v228 = vsel %vm127, %v44, 0
  %v231 = vsel %vm127, %v45, 0
  %v234 = vsel %vm127, %v46, 0
  %v237 = vsel %vm127, %v47, 0
  %v240 = vsel %vm127, %v48, 0
  %v243 = vsel %vm127, %v49, 0
  %v246 = vsel %vm127, %v50, 0
  %v249 = vsel %vm127, %v51, 0
  %v252 = vsel %vm127, %v52, 0
  %v255 = vsel %vm127, %v53, 0
  %v258 = vsel %vm127, %v54, 0
  %v261 = vsel %vm127, %v55, 0
  %v264 = vsel %vm127, %v56, 0
  %v267 = vsel %vm127, %v57, 0
  %v270 = vsel %vm127, %v58, 0
  %v273 = vsel %vm127, %v59, 0
  %v276 = vsel %vm127, %v60, 0
  %v279 = vsel %vm127, %v61, 0
  %v282 = vsel %vm127, %v62, 0
  %v285 = vsel %vm127, %v63, 0
  %v288 = vsel %vm127, %v64, 0
  %v291 = vsel %vm127, %v65, 0
  %v294 = vsel %vm127, %v66, 0
  %v297 = vsel %vm127, %v67, 0
  %v300 = vsel %vm127, %v68, 0
  %v303 = vsel %vm127, %v69, 0
  %v306 = vsel %vm127, %v70, 0
  %v309 = vsel %vm127, %v71, 0
  %v312 = vsel %vm127, %v72, 0
  %v315 = vsel %vm127, %v73, 0
  %v318 = vsel %vm127, %v74, 0
  %v321 = vsel %vm127, %v75, 0
  %v324 = vsel %vm127, %v76, 0
  %v327 = vsel %vm127, %v77, 0
  %v330 = vsel %vm127, %v78, 0
  %v333 = vsel %vm127, %v79, 0
  %v336 = vsel %vm127, %v80, 0
  %v339 = vsel %vm127, %v81, 0
  %v342 = vsel %vm127, %v82, 0
  %v345 = vsel %vm127, %v83, 0
  %v348 = vsel %vm127, %v84, 0
  %v351 = vsel %vm127, %v85, 0
  %v354 = vsel %vm127, %v86, 0
  %v357 = vsel %vm127, %v87, 0
  %v360 = vsel %vm127, %v88, 0
  %v363 = vsel %vm127, %v89, 0
  %v366 = vsel %vm127, %v90, 0
  %v369 = vsel %vm127, %v91, 0
  %v372 = vsel %vm127, %v92, 0
  %v375 = vsel %vm127, %v93, 0
  %v378 = vsel %vm127, %v94, 0
  %v381 = vsel %vm127, %v95, 0
  %v384 = vsel %vm127, %v96, 0
  %v387 = vsel %vm127, %v97, 0
  %v390 = vsel %vm127, %v98, 0
  %v393 = vsel %vm127, %v99, 0
  %v396 = vsel %vm127, %v100, 0
  %v399 = vsel %vm127, %v101, 0
  %v402 = vsel %vm127, %v102, 0
  %v405 = vsel %vm127, %v103, 0
  %v408 = vsel %vm127, %v104, 0
  %v411 = vsel %vm127, %v105, 0
  %v414 = vsel %vm127, %v106, 0
  %v417 = vsel %vm127, %v107, 0
  %v420 = vsel %vm127, %v108, 0
  %v423 = vsel %vm127, %v109, 0
  %v426 = vsel %vm127, %v110, 0
  %v429 = vsel %vm127, %v111, 0
  %v432 = vsel %vm127, %v112, 0
  %v435 = vsel %vm127, %v113, 0
  %v438 = vsel %vm127, %v114, 0
  %v441 = vsel %vm127, %v115, 0
  %v444 = vsel %vm127, %v116, 0
  %v447 = vsel %vm127, %v117, 0
  %v450 = vsel %vm127, %v118, 0
  %v453 = vsel %vm127, %v119, 0
  %v456 = vsel %vm127, %v120, 0
  %v459 = vsel %vm127, %v121, 0
  %v462 = vsel %vm127, %v122, 0
  %464 = vmatprep.subr.mxu0 0.0
  %465 = vmatpush1.msra.mxu0 0.0
  %466 = vmatprep.subr.mxu0 0.0
  %467 = vmatpush1.msra.mxu0 0.0
  %468 = vmatprep.subr.mxu0 0.0
  %469 = vmatpush1.msra.mxu0 0.0
  %470 = vmatprep.subr.mxu0 0.0
  %471 = vmatpush1.msra.mxu0 0.0
  %472 = vmatprep.subr.mxu0 0.0
  %473 = vmatpush1.msra.mxu0 0.0
  %474 = vmatprep.subr.mxu0 0.0
  %475 = vmatpush1.msra.mxu0 0.0
  %476 = vmatprep.subr.mxu0 0.0
  %477 = vmatpush1.msra.mxu0 0.0
  %478 = vmatprep.subr.mxu0 0.0
  %479 = vmatpush1.msra.mxu0 0.0
  %480 = vmatprep.subr.mxu0 0.0
  %481 = vmatpush1.msra.mxu0 0.0
  %482 = vmatprep.subr.mxu0 0.0
  %483 = vmatpush1.msra.mxu0 0.0
  %484 = vmatprep.subr.mxu0 0.0
  %485 = vmatpush1.msra.mxu0 0.0
  %486 = vmatprep.subr.mxu0 0.0
  %487 = vmatpush1.msra.mxu0 0.0
  %488 = vmatprep.subr.mxu0 0.0
  %489 = vmatpush1.msra.mxu0 %v126
  %490 = vmatprep.subr.mxu0 0.0
  %491 = vmatpush1.msra.mxu0 %v125
  %492 = vmatprep.subr.mxu0 0.0
  %493 = vmatpush1.msra.mxu0 %v124
  %494 = vmatprep.subr.mxu0 0.0
  %495 = vmatpush1.msra.mxu0 %v123
  %496 = vmatprep.subr.mxu0 0.0
  %497 = vmatpush2.msra.mxu0 0.0
  %498 = vmatprep.subr.mxu0 0.0
  %499 = vmatpush2.msra.mxu0 0.0
  %500 = vmatprep.subr.mxu0 0.0
  %501 = vmatpush2.msra.mxu0 0.0
  %502 = vmatprep.subr.mxu0 0.0
  %503 = vmatpush2.msra.mxu0 0.0
  %504 = vmatprep.subr.mxu0 0.0
  %505 = vmatpush2.msra.mxu0 0.0
  %506 = vmatprep.subr.mxu0 0.0
  %507 = vmatpush2.msra.mxu0 0.0
  %508 = vmatprep.subr.mxu0 0.0
  %509 = vmatpush2.msra.mxu0 0.0
  %510 = vmatprep.subr.mxu0 0.0
  %511 = vmatpush2.msra.mxu0 0.0
  %512 = vmatprep.subr.mxu0 0.0
  %513 = vmatpush2.msra.mxu0 0.0
  %514 = vmatprep.subr.mxu0 0.0
  %515 = vmatpush2.msra.mxu0 0.0
  %516 = vmatprep.subr.mxu0 0.0
  %517 = vmatpush2.msra.mxu0 0.0
  %518 = vmatprep.subr.mxu0 0.0
  %519 = vmatpush2.msra.mxu0 0.0
  %520 = vmatprep.subr.mxu0 0.0
  %521 = vmatpush2.msra.mxu0 0.0
  %522 = vmatprep.subr.mxu0 0.0
  %523 = vmatpush2.msra.mxu0 0.0
  %524 = vmatprep.subr.mxu0 0.0
  %525 = vmatpush2.msra.mxu0 0.0
  %526 = vmatprep.subr.mxu0 0.0
  %527 = vmatpush2.msra.mxu0 0.0
  %528 = vmatprep.mubr.f32.mxu0 0.0
  %529 = vmatmul.mubr.f32.gmra.mxu0 %v129
  %v530 = vpop.f32.mrf.mxu0
  %v531 = vadd.f32 0.0, %v530
  %v532 = vpop.f32.mrf.mxu0
  %533 = vmatprep.mubr.f32.mxu0 0.0
  %534 = vmatmul.mubr.f32.gmra.mxu0 %v132
  %v535 = vpop.f32.mrf.mxu0
  %v536 = vadd.f32 0.0, %v535
  %v537 = vpop.f32.mrf.mxu0
  %538 = vmatprep.mubr.f32.mxu0 0.0
  %539 = vmatmul.mubr.f32.gmra.mxu0 %v135
  %v540 = vpop.f32.mrf.mxu0
  %v541 = vadd.f32 0.0, %v540
  %v542 = vpop.f32.mrf.mxu0
  %543 = vmatprep.mubr.f32.mxu0 0.0
  %544 = vmatmul.mubr.f32.gmra.mxu0 %v138
  %v545 = vpop.f32.mrf.mxu0
  %v546 = vadd.f32 0.0, %v545
  %v547 = vpop.f32.mrf.mxu0
  %548 = vmatprep.mubr.f32.mxu0 0.0
  %549 = vmatmul.mubr.f32.gmra.mxu0 %v141
  %v550 = vpop.f32.mrf.mxu0
  %v551 = vadd.f32 0.0, %v550
  %v552 = vpop.f32.mrf.mxu0
  %553 = vmatprep.mubr.f32.mxu0 0.0
  %554 = vmatmul.mubr.f32.gmra.mxu0 %v144
  %v555 = vpop.f32.mrf.mxu0
  %v556 = vadd.f32 0.0, %v555
  %v557 = vpop.f32.mrf.mxu0
  %558 = vmatprep.mubr.f32.mxu0 0.0
  %559 = vmatmul.mubr.f32.gmra.mxu0 %v147
  %v560 = vpop.f32.mrf.mxu0
  %v561 = vadd.f32 0.0, %v560
  %v562 = vpop.f32.mrf.mxu0
  %563 = vmatprep.mubr.f32.mxu0 0.0
  %564 = vmatmul.mubr.f32.gmra.mxu0 %v150
  %v565 = vpop.f32.mrf.mxu0
  %v566 = vadd.f32 0.0, %v565
  %v567 = vpop.f32.mrf.mxu0
  %568 = vmatprep.mubr.f32.mxu0 0.0
  %569 = vmatmul.mubr.f32.gmra.mxu0 %v153
  %v570 = vpop.f32.mrf.mxu0
  %v571 = vadd.f32 0.0, %v570
  %v572 = vpop.f32.mrf.mxu0
  %573 = vmatprep.mubr.f32.mxu0 0.0
  %574 = vmatmul.mubr.f32.gmra.mxu0 %v156
  %v575 = vpop.f32.mrf.mxu0
  %v576 = vadd.f32 0.0, %v575
  %v577 = vpop.f32.mrf.mxu0
  %578 = vmatprep.mubr.f32.mxu0 0.0
  %579 = vmatmul.mubr.f32.gmra.mxu0 %v159
  %v580 = vpop.f32.mrf.mxu0
  %v581 = vadd.f32 0.0, %v580
  %v582 = vpop.f32.mrf.mxu0
  %583 = vmatprep.mubr.f32.mxu0 0.0
  %584 = vmatmul.mubr.f32.gmra.mxu0 %v162
  %v585 = vpop.f32.mrf.mxu0
  %v586 = vadd.f32 0.0, %v585
  %v587 = vpop.f32.mrf.mxu0
  %588 = vmatprep.mubr.f32.mxu0 0.0
  %589 = vmatmul.mubr.f32.gmra.mxu0 %v165
  %v590 = vpop.f32.mrf.mxu0
  %v591 = vadd.f32 0.0, %v590
  %v592 = vpop.f32.mrf.mxu0
  %593 = vmatprep.mubr.f32.mxu0 0.0
  %594 = vmatmul.mubr.f32.gmra.mxu0 %v168
  %v595 = vpop.f32.mrf.mxu0
  %v596 = vadd.f32 0.0, %v595
  %v597 = vpop.f32.mrf.mxu0
  %598 = vmatprep.mubr.f32.mxu0 0.0
  %599 = vmatmul.mubr.f32.gmra.mxu0 %v171
  %v600 = vpop.f32.mrf.mxu0
  %v601 = vadd.f32 0.0, %v600
  %v602 = vpop.f32.mrf.mxu0
  %603 = vmatprep.mubr.f32.mxu0 0.0
  %604 = vmatmul.mubr.f32.gmra.mxu0 %v174
  %v605 = vpop.f32.mrf.mxu0
  %v606 = vadd.f32 0.0, %v605
  %v607 = vpop.f32.mrf.mxu0
  %608 = vmatprep.mubr.f32.mxu0 0.0
  %609 = vmatmul.mubr.f32.gmra.mxu0 %v177
  %v610 = vpop.f32.mrf.mxu0
  %v611 = vadd.f32 0.0, %v610
  %v612 = vpop.f32.mrf.mxu0
  %613 = vmatprep.mubr.f32.mxu0 0.0
  %614 = vmatmul.mubr.f32.gmra.mxu0 %v180
  %v615 = vpop.f32.mrf.mxu0
  %v616 = vadd.f32 0.0, %v615
  %v617 = vpop.f32.mrf.mxu0
  %618 = vmatprep.mubr.f32.mxu0 0.0
  %619 = vmatmul.mubr.f32.gmra.mxu0 %v183
  %v620 = vpop.f32.mrf.mxu0
  %v621 = vadd.f32 0.0, %v620
  %v622 = vpop.f32.mrf.mxu0
  %623 = vmatprep.mubr.f32.mxu0 0.0
  %624 = vmatmul.mubr.f32.gmra.mxu0 %v186
  %v625 = vpop.f32.mrf.mxu0
  %v626 = vadd.f32 0.0, %v625
  %v627 = vpop.f32.mrf.mxu0
  %628 = vmatprep.mubr.f32.mxu0 0.0
  %629 = vmatmul.mubr.f32.gmra.mxu0 %v189
  %v630 = vpop.f32.mrf.mxu0
  %v631 = vadd.f32 0.0, %v630
  %v632 = vpop.f32.mrf.mxu0
  %633 = vmatprep.mubr.f32.mxu0 0.0
  %634 = vmatmul.mubr.f32.gmra.mxu0 %v192
  %v635 = vpop.f32.mrf.mxu0
  %v636 = vadd.f32 0.0, %v635
  %v637 = vpop.f32.mrf.mxu0
  %638 = vmatprep.mubr.f32.mxu0 0.0
  %639 = vmatmul.mubr.f32.gmra.mxu0 %v195
  %v640 = vpop.f32.mrf.mxu0
  %v641 = vadd.f32 0.0, %v640
  %v642 = vpop.f32.mrf.mxu0
  %643 = vmatprep.mubr.f32.mxu0 0.0
  %644 = vmatmul.mubr.f32.gmra.mxu0 %v198
  %v645 = vpop.f32.mrf.mxu0
  %v646 = vadd.f32 0.0, %v645
  %v647 = vpop.f32.mrf.mxu0
  %648 = vmatprep.mubr.f32.mxu0 0.0
  %649 = vmatmul.mubr.f32.gmra.mxu0 %v201
  %v650 = vpop.f32.mrf.mxu0
  %v651 = vadd.f32 0.0, %v650
  %v652 = vpop.f32.mrf.mxu0
  %653 = vmatprep.mubr.f32.mxu0 0.0
  %654 = vmatmul.mubr.f32.gmra.mxu0 %v204
  %v655 = vpop.f32.mrf.mxu0
  %v656 = vadd.f32 0.0, %v655
  %v657 = vpop.f32.mrf.mxu0
  %658 = vmatprep.mubr.f32.mxu0 0.0
  %659 = vmatmul.mubr.f32.gmra.mxu0 %v207
  %v660 = vpop.f32.mrf.mxu0
  %v661 = vadd.f32 0.0, %v660
  %v662 = vpop.f32.mrf.mxu0
  %663 = vmatprep.mubr.f32.mxu0 0.0
  %664 = vmatmul.mubr.f32.gmra.mxu0 %v210
  %v665 = vpop.f32.mrf.mxu0
  %v666 = vadd.f32 0.0, %v665
  %v667 = vpop.f32.mrf.mxu0
  %668 = vmatprep.mubr.f32.mxu0 0.0
  %669 = vmatmul.mubr.f32.gmra.mxu0 %v213
  %v670 = vpop.f32.mrf.mxu0
  %v671 = vadd.f32 0.0, %v670
  %v672 = vpop.f32.mrf.mxu0
  %673 = vmatprep.mubr.f32.mxu0 0.0
  %674 = vmatmul.mubr.f32.gmra.mxu0 %v216
  %v675 = vpop.f32.mrf.mxu0
  %v676 = vadd.f32 0.0, %v675
  %v677 = vpop.f32.mrf.mxu0
  %678 = vmatprep.mubr.f32.mxu0 0.0
  %679 = vmatmul.mubr.f32.gmra.mxu0 %v219
  %v680 = vpop.f32.mrf.mxu0
  %v681 = vadd.f32 0.0, %v680
  %v682 = vpop.f32.mrf.mxu0
  %683 = vmatprep.mubr.f32.mxu0 0.0
  %684 = vmatmul.mubr.f32.gmra.mxu0 %v222
  %v685 = vpop.f32.mrf.mxu0
  %v686 = vadd.f32 0.0, %v685
  %v687 = vpop.f32.mrf.mxu0
  %688 = vmatprep.mubr.f32.mxu0 0.0
  %689 = vmatmul.mubr.f32.gmra.mxu0 %v225
  %v690 = vpop.f32.mrf.mxu0
  %v691 = vadd.f32 0.0, %v690
  %v692 = vpop.f32.mrf.mxu0
  %693 = vmatprep.mubr.f32.mxu0 0.0
  %694 = vmatmul.mubr.f32.gmra.mxu0 %v228
  %v695 = vpop.f32.mrf.mxu0
  %v696 = vadd.f32 0.0, %v695
  %v697 = vpop.f32.mrf.mxu0
  %698 = vmatprep.mubr.f32.mxu0 0.0
  %699 = vmatmul.mubr.f32.gmra.mxu0 %v231
  %v700 = vpop.f32.mrf.mxu0
  %v701 = vadd.f32 0.0, %v700
  %v702 = vpop.f32.mrf.mxu0
  %703 = vmatprep.mubr.f32.mxu0 0.0
  %704 = vmatmul.mubr.f32.gmra.mxu0 %v234
  %v705 = vpop.f32.mrf.mxu0
  %v706 = vadd.f32 0.0, %v705
  %v707 = vpop.f32.mrf.mxu0
  %708 = vmatprep.mubr.f32.mxu0 0.0
  %709 = vmatmul.mubr.f32.gmra.mxu0 %v237
  %v710 = vpop.f32.mrf.mxu0
  %v711 = vadd.f32 0.0, %v710
  %v712 = vpop.f32.mrf.mxu0
  %713 = vmatprep.mubr.f32.mxu0 0.0
  %714 = vmatmul.mubr.f32.gmra.mxu0 %v240
  %v715 = vpop.f32.mrf.mxu0
  %v716 = vadd.f32 0.0, %v715
  %v717 = vpop.f32.mrf.mxu0
  %718 = vmatprep.mubr.f32.mxu0 0.0
  %719 = vmatmul.mubr.f32.gmra.mxu0 %v243
  %v720 = vpop.f32.mrf.mxu0
  %v721 = vadd.f32 0.0, %v720
  %v722 = vpop.f32.mrf.mxu0
  %723 = vmatprep.mubr.f32.mxu0 0.0
  %724 = vmatmul.mubr.f32.gmra.mxu0 %v246
  %v725 = vpop.f32.mrf.mxu0
  %v726 = vadd.f32 0.0, %v725
  %v727 = vpop.f32.mrf.mxu0
  %728 = vmatprep.mubr.f32.mxu0 0.0
  %729 = vmatmul.mubr.f32.gmra.mxu0 %v249
  %v730 = vpop.f32.mrf.mxu0
  %v731 = vadd.f32 0.0, %v730
  %v732 = vpop.f32.mrf.mxu0
  %733 = vmatprep.mubr.f32.mxu0 0.0
  %734 = vmatmul.mubr.f32.gmra.mxu0 %v252
  %v735 = vpop.f32.mrf.mxu0
  %v736 = vadd.f32 0.0, %v735
  %v737 = vpop.f32.mrf.mxu0
  %738 = vmatprep.mubr.f32.mxu0 0.0
  %739 = vmatmul.mubr.f32.gmra.mxu0 %v255
  %v740 = vpop.f32.mrf.mxu0
  %v741 = vadd.f32 0.0, %v740
  %v742 = vpop.f32.mrf.mxu0
  %743 = vmatprep.mubr.f32.mxu0 0.0
  %744 = vmatmul.mubr.f32.gmra.mxu0 %v258
  %v745 = vpop.f32.mrf.mxu0
  %v746 = vadd.f32 0.0, %v745
  %v747 = vpop.f32.mrf.mxu0
  %748 = vmatprep.mubr.f32.mxu0 0.0
  %749 = vmatmul.mubr.f32.gmra.mxu0 %v261
  %v750 = vpop.f32.mrf.mxu0
  %v751 = vadd.f32 0.0, %v750
  %v752 = vpop.f32.mrf.mxu0
  %753 = vmatprep.mubr.f32.mxu0 0.0
  %754 = vmatmul.mubr.f32.gmra.mxu0 %v264
  %v755 = vpop.f32.mrf.mxu0
  %v756 = vadd.f32 0.0, %v755
  %v757 = vpop.f32.mrf.mxu0
  %758 = vmatprep.mubr.f32.mxu0 0.0
  %759 = vmatmul.mubr.f32.gmra.mxu0 %v267
  %v760 = vpop.f32.mrf.mxu0
  %v761 = vadd.f32 0.0, %v760
  %v762 = vpop.f32.mrf.mxu0
  %763 = vmatprep.mubr.f32.mxu0 0.0
  %764 = vmatmul.mubr.f32.gmra.mxu0 %v270
  %v765 = vpop.f32.mrf.mxu0
  %v766 = vadd.f32 0.0, %v765
  %v767 = vpop.f32.mrf.mxu0
  %768 = vmatprep.mubr.f32.mxu0 0.0
  %769 = vmatmul.mubr.f32.gmra.mxu0 %v273
  %v770 = vpop.f32.mrf.mxu0
  %v771 = vadd.f32 0.0, %v770
  %v772 = vpop.f32.mrf.mxu0
  %773 = vmatprep.mubr.f32.mxu0 0.0
  %774 = vmatmul.mubr.f32.gmra.mxu0 %v276
  %v775 = vpop.f32.mrf.mxu0
  %v776 = vadd.f32 0.0, %v775
  %v777 = vpop.f32.mrf.mxu0
  %778 = vmatprep.mubr.f32.mxu0 0.0
  %779 = vmatmul.mubr.f32.gmra.mxu0 %v279
  %v780 = vpop.f32.mrf.mxu0
  %v781 = vadd.f32 0.0, %v780
  %v782 = vpop.f32.mrf.mxu0
  %783 = vmatprep.mubr.f32.mxu0 0.0
  %784 = vmatmul.mubr.f32.gmra.mxu0 %v282
  %v785 = vpop.f32.mrf.mxu0
  %v786 = vadd.f32 0.0, %v785
  %v787 = vpop.f32.mrf.mxu0
  %788 = vmatprep.mubr.f32.mxu0 0.0
  %789 = vmatmul.mubr.f32.gmra.mxu0 %v285
  %v790 = vpop.f32.mrf.mxu0
  %v791 = vadd.f32 0.0, %v790
  %v792 = vpop.f32.mrf.mxu0
  %793 = vmatprep.mubr.f32.mxu0 0.0
  %794 = vmatmul.mubr.f32.gmra.mxu0 %v288
  %v795 = vpop.f32.mrf.mxu0
  %v796 = vadd.f32 0.0, %v795
  %v797 = vpop.f32.mrf.mxu0
  %798 = vmatprep.mubr.f32.mxu0 0.0
  %799 = vmatmul.mubr.f32.gmra.mxu0 %v291
  %v800 = vpop.f32.mrf.mxu0
  %v801 = vadd.f32 0.0, %v800
  %v802 = vpop.f32.mrf.mxu0
  %803 = vmatprep.mubr.f32.mxu0 0.0
  %804 = vmatmul.mubr.f32.gmra.mxu0 %v294
  %v805 = vpop.f32.mrf.mxu0
  %v806 = vadd.f32 0.0, %v805
  %v807 = vpop.f32.mrf.mxu0
  %808 = vmatprep.mubr.f32.mxu0 0.0
  %809 = vmatmul.mubr.f32.gmra.mxu0 %v297
  %v810 = vpop.f32.mrf.mxu0
  %v811 = vadd.f32 0.0, %v810
  %v812 = vpop.f32.mrf.mxu0
  %813 = vmatprep.mubr.f32.mxu0 0.0
  %814 = vmatmul.mubr.f32.gmra.mxu0 %v300
  %v815 = vpop.f32.mrf.mxu0
  %v816 = vadd.f32 0.0, %v815
  %v817 = vpop.f32.mrf.mxu0
  %818 = vmatprep.mubr.f32.mxu0 0.0
  %819 = vmatmul.mubr.f32.gmra.mxu0 %v303
  %v820 = vpop.f32.mrf.mxu0
  %v821 = vadd.f32 0.0, %v820
  %v822 = vpop.f32.mrf.mxu0
  %823 = vmatprep.mubr.f32.mxu0 0.0
  %824 = vmatmul.mubr.f32.gmra.mxu0 %v306
  %v825 = vpop.f32.mrf.mxu0
  %v826 = vadd.f32 0.0, %v825
  %v827 = vpop.f32.mrf.mxu0
  %828 = vmatprep.mubr.f32.mxu0 0.0
  %829 = vmatmul.mubr.f32.gmra.mxu0 %v309
  %v830 = vpop.f32.mrf.mxu0
  %v831 = vadd.f32 0.0, %v830
  %v832 = vpop.f32.mrf.mxu0
  %833 = vmatprep.mubr.f32.mxu0 0.0
  %834 = vmatmul.mubr.f32.gmra.mxu0 %v312
  %v835 = vpop.f32.mrf.mxu0
  %v836 = vadd.f32 0.0, %v835
  %v837 = vpop.f32.mrf.mxu0
  %838 = vmatprep.mubr.f32.mxu0 0.0
  %839 = vmatmul.mubr.f32.gmra.mxu0 %v315
  %v840 = vpop.f32.mrf.mxu0
  %v841 = vadd.f32 0.0, %v840
  %v842 = vpop.f32.mrf.mxu0
  %843 = vmatprep.mubr.f32.mxu0 0.0
  %844 = vmatmul.mubr.f32.gmra.mxu0 %v318
  %v845 = vpop.f32.mrf.mxu0
  %v846 = vadd.f32 0.0, %v845
  %v847 = vpop.f32.mrf.mxu0
  %848 = vmatprep.mubr.f32.mxu0 0.0
  %849 = vmatmul.mubr.f32.gmra.mxu0 %v321
  %v850 = vpop.f32.mrf.mxu0
  %v851 = vadd.f32 0.0, %v850
  %v852 = vpop.f32.mrf.mxu0
  %853 = vmatprep.mubr.f32.mxu0 0.0
  %854 = vmatmul.mubr.f32.gmra.mxu0 %v324
  %v855 = vpop.f32.mrf.mxu0
  %v856 = vadd.f32 0.0, %v855
  %v857 = vpop.f32.mrf.mxu0
  %858 = vmatprep.mubr.f32.mxu0 0.0
  %859 = vmatmul.mubr.f32.gmra.mxu0 %v327
  %v860 = vpop.f32.mrf.mxu0
  %v861 = vadd.f32 0.0, %v860
  %v862 = vpop.f32.mrf.mxu0
  %863 = vmatprep.mubr.f32.mxu0 0.0
  %864 = vmatmul.mubr.f32.gmra.mxu0 %v330
  %v865 = vpop.f32.mrf.mxu0
  %v866 = vadd.f32 0.0, %v865
  %v867 = vpop.f32.mrf.mxu0
  %868 = vmatprep.mubr.f32.mxu0 0.0
  %869 = vmatmul.mubr.f32.gmra.mxu0 %v333
  %v870 = vpop.f32.mrf.mxu0
  %v871 = vadd.f32 0.0, %v870
  %v872 = vpop.f32.mrf.mxu0
  %873 = vmatprep.mubr.f32.mxu0 0.0
  %874 = vmatmul.mubr.f32.gmra.mxu0 %v336
  %v875 = vpop.f32.mrf.mxu0
  %v876 = vadd.f32 0.0, %v875
  %v877 = vpop.f32.mrf.mxu0
  %878 = vmatprep.mubr.f32.mxu0 0.0
  %879 = vmatmul.mubr.f32.gmra.mxu0 %v339
  %v880 = vpop.f32.mrf.mxu0
  %v881 = vadd.f32 0.0, %v880
  %v882 = vpop.f32.mrf.mxu0
  %883 = vmatprep.mubr.f32.mxu0 0.0
  %884 = vmatmul.mubr.f32.gmra.mxu0 %v342
  %v885 = vpop.f32.mrf.mxu0
  %v886 = vadd.f32 0.0, %v885
  %v887 = vpop.f32.mrf.mxu0
  %888 = vmatprep.mubr.f32.mxu0 0.0
  %889 = vmatmul.mubr.f32.gmra.mxu0 %v345
  %v890 = vpop.f32.mrf.mxu0
  %v891 = vadd.f32 0.0, %v890
  %v892 = vpop.f32.mrf.mxu0
  %893 = vmatprep.mubr.f32.mxu0 0.0
  %894 = vmatmul.mubr.f32.gmra.mxu0 %v348
  %v895 = vpop.f32.mrf.mxu0
  %v896 = vadd.f32 0.0, %v895
  %v897 = vpop.f32.mrf.mxu0
  %898 = vmatprep.mubr.f32.mxu0 0.0
  %899 = vmatmul.mubr.f32.gmra.mxu0 %v351
  %v900 = vpop.f32.mrf.mxu0
  %v901 = vadd.f32 0.0, %v900
  %v902 = vpop.f32.mrf.mxu0
  %903 = vmatprep.mubr.f32.mxu0 0.0
  %904 = vmatmul.mubr.f32.gmra.mxu0 %v354
  %v905 = vpop.f32.mrf.mxu0
  %v906 = vadd.f32 0.0, %v905
  %v907 = vpop.f32.mrf.mxu0
  %908 = vmatprep.mubr.f32.mxu0 0.0
  %909 = vmatmul.mubr.f32.gmra.mxu0 %v357
  %v910 = vpop.f32.mrf.mxu0
  %v911 = vadd.f32 0.0, %v910
  %v912 = vpop.f32.mrf.mxu0
  %913 = vmatprep.mubr.f32.mxu0 0.0
  %914 = vmatmul.mubr.f32.gmra.mxu0 %v360
  %v915 = vpop.f32.mrf.mxu0
  %v916 = vadd.f32 0.0, %v915
  %v917 = vpop.f32.mrf.mxu0
  %918 = vmatprep.mubr.f32.mxu0 0.0
  %919 = vmatmul.mubr.f32.gmra.mxu0 %v363
  %v920 = vpop.f32.mrf.mxu0
  %v921 = vadd.f32 0.0, %v920
  %v922 = vpop.f32.mrf.mxu0
  %923 = vmatprep.mubr.f32.mxu0 0.0
  %924 = vmatmul.mubr.f32.gmra.mxu0 %v366
  %v925 = vpop.f32.mrf.mxu0
  %v926 = vadd.f32 0.0, %v925
  %v927 = vpop.f32.mrf.mxu0
  %928 = vmatprep.mubr.f32.mxu0 0.0
  %929 = vmatmul.mubr.f32.gmra.mxu0 %v369
  %v930 = vpop.f32.mrf.mxu0
  %v931 = vadd.f32 0.0, %v930
  %v932 = vpop.f32.mrf.mxu0
  %933 = vmatprep.mubr.f32.mxu0 0.0
  %934 = vmatmul.mubr.f32.gmra.mxu0 %v372
  %v935 = vpop.f32.mrf.mxu0
  %v936 = vadd.f32 0.0, %v935
  %v937 = vpop.f32.mrf.mxu0
  %938 = vmatprep.mubr.f32.mxu0 0.0
  %939 = vmatmul.mubr.f32.gmra.mxu0 %v375
  %v940 = vpop.f32.mrf.mxu0
  %v941 = vadd.f32 0.0, %v940
  %v942 = vpop.f32.mrf.mxu0
  %943 = vmatprep.mubr.f32.mxu0 0.0
  %944 = vmatmul.mubr.f32.gmra.mxu0 %v378
  %v945 = vpop.f32.mrf.mxu0
  %v946 = vadd.f32 0.0, %v945
  %v947 = vpop.f32.mrf.mxu0
  %948 = vmatprep.mubr.f32.mxu0 0.0
  %949 = vmatmul.mubr.f32.gmra.mxu0 %v381
  %v950 = vpop.f32.mrf.mxu0
  %v951 = vadd.f32 0.0, %v950
  %v952 = vpop.f32.mrf.mxu0
  %953 = vmatprep.mubr.f32.mxu0 0.0
  %954 = vmatmul.mubr.f32.gmra.mxu0 %v384
  %v955 = vpop.f32.mrf.mxu0
  %v956 = vadd.f32 0.0, %v955
  %v957 = vpop.f32.mrf.mxu0
  %958 = vmatprep.mubr.f32.mxu0 0.0
  %959 = vmatmul.mubr.f32.gmra.mxu0 %v387
  %v960 = vpop.f32.mrf.mxu0
  %v961 = vadd.f32 0.0, %v960
  %v962 = vpop.f32.mrf.mxu0
  %963 = vmatprep.mubr.f32.mxu0 0.0
  %964 = vmatmul.mubr.f32.gmra.mxu0 %v390
  %v965 = vpop.f32.mrf.mxu0
  %v966 = vadd.f32 0.0, %v965
  %v967 = vpop.f32.mrf.mxu0
  %968 = vmatprep.mubr.f32.mxu0 0.0
  %969 = vmatmul.mubr.f32.gmra.mxu0 %v393
  %v970 = vpop.f32.mrf.mxu0
  %v971 = vadd.f32 0.0, %v970
  %v972 = vpop.f32.mrf.mxu0
  %973 = vmatprep.mubr.f32.mxu0 0.0
  %974 = vmatmul.mubr.f32.gmra.mxu0 %v396
  %v975 = vpop.f32.mrf.mxu0
  %v976 = vadd.f32 0.0, %v975
  %v977 = vpop.f32.mrf.mxu0
  %978 = vmatprep.mubr.f32.mxu0 0.0
  %979 = vmatmul.mubr.f32.gmra.mxu0 %v399
  %v980 = vpop.f32.mrf.mxu0
  %v981 = vadd.f32 0.0, %v980
  %v982 = vpop.f32.mrf.mxu0
  %983 = vmatprep.mubr.f32.mxu0 0.0
  %984 = vmatmul.mubr.f32.gmra.mxu0 %v402
  %v985 = vpop.f32.mrf.mxu0
  %v986 = vadd.f32 0.0, %v985
  %v987 = vpop.f32.mrf.mxu0
  %988 = vmatprep.mubr.f32.mxu0 0.0
  %989 = vmatmul.mubr.f32.gmra.mxu0 %v405
  %v990 = vpop.f32.mrf.mxu0
  %v991 = vadd.f32 0.0, %v990
  %v992 = vpop.f32.mrf.mxu0
  %993 = vmatprep.mubr.f32.mxu0 0.0
  %994 = vmatmul.mubr.f32.gmra.mxu0 %v408
  %v995 = vpop.f32.mrf.mxu0
  %v996 = vadd.f32 0.0, %v995
  %v997 = vpop.f32.mrf.mxu0
  %998 = vmatprep.mubr.f32.mxu0 0.0
  %999 = vmatmul.mubr.f32.gmra.mxu0 %v411
  %v1000 = vpop.f32.mrf.mxu0
  %v1001 = vadd.f32 0.0, %v1000
  %v1002 = vpop.f32.mrf.mxu0
  %1003 = vmatprep.mubr.f32.mxu0 0.0
  %1004 = vmatmul.mubr.f32.gmra.mxu0 %v414
  %v1005 = vpop.f32.mrf.mxu0
  %v1006 = vadd.f32 0.0, %v1005
  %v1007 = vpop.f32.mrf.mxu0
  %1008 = vmatprep.mubr.f32.mxu0 0.0
  %1009 = vmatmul.mubr.f32.gmra.mxu0 %v417
  %v1010 = vpop.f32.mrf.mxu0
  %v1011 = vadd.f32 0.0, %v1010
  %v1012 = vpop.f32.mrf.mxu0
  %1013 = vmatprep.mubr.f32.mxu0 0.0
  %1014 = vmatmul.mubr.f32.gmra.mxu0 %v420
  %v1015 = vpop.f32.mrf.mxu0
  %v1016 = vadd.f32 0.0, %v1015
  %v1017 = vpop.f32.mrf.mxu0
  %1018 = vmatprep.mubr.f32.mxu0 0.0
  %1019 = vmatmul.mubr.f32.gmra.mxu0 %v423
  %v1020 = vpop.f32.mrf.mxu0
  %v1021 = vadd.f32 0.0, %v1020
  %v1022 = vpop.f32.mrf.mxu0
  %1023 = vmatprep.mubr.f32.mxu0 0.0
  %1024 = vmatmul.mubr.f32.gmra.mxu0 %v426
  %v1025 = vpop.f32.mrf.mxu0
  %v1026 = vadd.f32 0.0, %v1025
  %v1027 = vpop.f32.mrf.mxu0
  %1028 = vmatprep.mubr.f32.mxu0 0.0
  %1029 = vmatmul.mubr.f32.gmra.mxu0 %v429
  %v1030 = vpop.f32.mrf.mxu0
  %v1031 = vadd.f32 0.0, %v1030
  %v1032 = vpop.f32.mrf.mxu0
  %1033 = vmatprep.mubr.f32.mxu0 0.0
  %1034 = vmatmul.mubr.f32.gmra.mxu0 %v432
  %v1035 = vpop.f32.mrf.mxu0
  %v1036 = vadd.f32 0.0, %v1035
  %v1037 = vpop.f32.mrf.mxu0
  %1038 = vmatprep.mubr.f32.mxu0 0.0
  %1039 = vmatmul.mubr.f32.gmra.mxu0 %v435
  %v1040 = vpop.f32.mrf.mxu0
  %v1041 = vadd.f32 0.0, %v1040
  %v1042 = vpop.f32.mrf.mxu0
  %1043 = vmatprep.mubr.f32.mxu0 0.0
  %1044 = vmatmul.mubr.f32.gmra.mxu0 %v438
  %v1045 = vpop.f32.mrf.mxu0
  %v1046 = vadd.f32 0.0, %v1045
  %v1047 = vpop.f32.mrf.mxu0
  %1048 = vmatprep.mubr.f32.mxu0 0.0
  %1049 = vmatmul.mubr.f32.gmra.mxu0 %v441
  %v1050 = vpop.f32.mrf.mxu0
  %v1051 = vadd.f32 0.0, %v1050
  %v1052 = vpop.f32.mrf.mxu0
  %1053 = vmatprep.mubr.f32.mxu0 0.0
  %1054 = vmatmul.mubr.f32.gmra.mxu0 %v444
  %v1055 = vpop.f32.mrf.mxu0
  %v1056 = vadd.f32 0.0, %v1055
  %v1057 = vpop.f32.mrf.mxu0
  %1058 = vmatprep.mubr.f32.mxu0 0.0
  %1059 = vmatmul.mubr.f32.gmra.mxu0 %v447
  %v1060 = vpop.f32.mrf.mxu0
  %v1061 = vadd.f32 0.0, %v1060
  %v1062 = vpop.f32.mrf.mxu0
  %1063 = vmatprep.mubr.f32.mxu0 0.0
  %1064 = vmatmul.mubr.f32.gmra.mxu0 %v450
  %v1065 = vpop.f32.mrf.mxu0
  %v1066 = vadd.f32 0.0, %v1065
  %v1067 = vpop.f32.mrf.mxu0
  %1068 = vmatprep.mubr.f32.mxu0 0.0
  %1069 = vmatmul.mubr.f32.gmra.mxu0 %v453
  %v1070 = vpop.f32.mrf.mxu0
  %v1071 = vadd.f32 0.0, %v1070
  %v1072 = vpop.f32.mrf.mxu0
  %1073 = vmatprep.mubr.f32.mxu0 0.0
  %1074 = vmatmul.mubr.f32.gmra.mxu0 %v456
  %v1075 = vpop.f32.mrf.mxu0
  %v1076 = vadd.f32 0.0, %v1075
  %v1077 = vpop.f32.mrf.mxu0
  %1078 = vmatprep.mubr.f32.mxu0 0.0
  %1079 = vmatmul.mubr.f32.gmra.mxu0 %v459
  %v1080 = vpop.f32.mrf.mxu0
  %v1081 = vadd.f32 0.0, %v1080
  %v1082 = vpop.f32.mrf.mxu0
  %1083 = vmatprep.mubr.f32.mxu0 0.0
  %1084 = vmatmul.mubr.f32.gmra.mxu0 %v462
  %v1085 = vpop.f32.mrf.mxu0
  %v1086 = vadd.f32 0.0, %v1085
  %v1087 = vpop.f32.mrf.mxu0
  %1088 = vdwg.mxu0
  %v1089 = vmul.f32 %v531, %v531
  %v1090 = vmul.f32 %v536, %v536
  %v1091 = vmul.f32 %v541, %v541
  %v1092 = vmul.f32 %v546, %v546
  %v1093 = vmul.f32 %v551, %v551
  %v1094 = vmul.f32 %v556, %v556
  %v1095 = vmul.f32 %v561, %v561
  %v1096 = vmul.f32 %v566, %v566
  %v1097 = vmul.f32 %v571, %v571
  %v1098 = vmul.f32 %v576, %v576
  %v1099 = vmul.f32 %v581, %v581
  %v1100 = vmul.f32 %v586, %v586
  %v1101 = vmul.f32 %v591, %v591
  %v1102 = vmul.f32 %v596, %v596
  %v1103 = vmul.f32 %v601, %v601
  %v1104 = vmul.f32 %v606, %v606
  %v1105 = vmul.f32 %v611, %v611
  %v1106 = vmul.f32 %v616, %v616
  %v1107 = vmul.f32 %v621, %v621
  %v1108 = vmul.f32 %v626, %v626
  %v1109 = vmul.f32 %v631, %v631
  %v1110 = vmul.f32 %v636, %v636
  %v1111 = vmul.f32 %v641, %v641
  %v1112 = vmul.f32 %v646, %v646
  %v1113 = vmul.f32 %v651, %v651
  %v1114 = vmul.f32 %v656, %v656
  %v1115 = vmul.f32 %v661, %v661
  %v1116 = vmul.f32 %v666, %v666
  %v1117 = vmul.f32 %v671, %v671
  %v1118 = vmul.f32 %v676, %v676
  %v1119 = vmul.f32 %v681, %v681
  %v1120 = vmul.f32 %v686, %v686
  %v1121 = vmul.f32 %v691, %v691
  %v1122 = vmul.f32 %v696, %v696
  %v1123 = vmul.f32 %v701, %v701
  %v1124 = vmul.f32 %v706, %v706
  %v1125 = vmul.f32 %v711, %v711
  %v1126 = vmul.f32 %v716, %v716
  %v1127 = vmul.f32 %v721, %v721
  %v1128 = vmul.f32 %v726, %v726
  %v1129 = vmul.f32 %v731, %v731
  %v1130 = vmul.f32 %v736, %v736
  %v1131 = vmul.f32 %v741, %v741
  %v1132 = vmul.f32 %v746, %v746
  %v1133 = vmul.f32 %v751, %v751
  %v1134 = vmul.f32 %v756, %v756
  %v1135 = vmul.f32 %v761, %v761
  %v1136 = vmul.f32 %v766, %v766
  %v1137 = vmul.f32 %v771, %v771
  %v1138 = vmul.f32 %v776, %v776
  %v1139 = vmul.f32 %v781, %v781
  %v1140 = vmul.f32 %v786, %v786
  %v1141 = vmul.f32 %v791, %v791
  %v1142 = vmul.f32 %v796, %v796
  %v1143 = vmul.f32 %v801, %v801
  %v1144 = vmul.f32 %v806, %v806
  %v1145 = vmul.f32 %v811, %v811
  %v1146 = vmul.f32 %v816, %v816
  %v1147 = vmul.f32 %v821, %v821
  %v1148 = vmul.f32 %v826, %v826
  %v1149 = vmul.f32 %v831, %v831
  %v1150 = vmul.f32 %v836, %v836
  %v1151 = vmul.f32 %v841, %v841
  %v1152 = vmul.f32 %v846, %v846
  %v1153 = vmul.f32 %v851, %v851
  %v1154 = vmul.f32 %v856, %v856
  %v1155 = vmul.f32 %v861, %v861
  %v1156 = vmul.f32 %v866, %v866
  %v1157 = vmul.f32 %v871, %v871
  %v1158 = vmul.f32 %v876, %v876
  %v1159 = vmul.f32 %v881, %v881
  %v1160 = vmul.f32 %v886, %v886
  %v1161 = vmul.f32 %v891, %v891
  %v1162 = vmul.f32 %v896, %v896
  %v1163 = vmul.f32 %v901, %v901
  %v1164 = vmul.f32 %v906, %v906
  %v1165 = vmul.f32 %v911, %v911
  %v1166 = vmul.f32 %v916, %v916
  %v1167 = vmul.f32 %v921, %v921
  %v1168 = vmul.f32 %v926, %v926
  %v1169 = vmul.f32 %v931, %v931
  %v1170 = vmul.f32 %v936, %v936
  %v1171 = vmul.f32 %v941, %v941
  %v1172 = vmul.f32 %v946, %v946
  %v1173 = vmul.f32 %v951, %v951
  %v1174 = vmul.f32 %v956, %v956
  %v1175 = vmul.f32 %v961, %v961
  %v1176 = vmul.f32 %v966, %v966
  %v1177 = vmul.f32 %v971, %v971
  %v1178 = vmul.f32 %v976, %v976
  %v1179 = vmul.f32 %v981, %v981
  %v1180 = vmul.f32 %v986, %v986
  %v1181 = vmul.f32 %v991, %v991
  %v1182 = vmul.f32 %v996, %v996
  %v1183 = vmul.f32 %v1001, %v1001
  %v1184 = vmul.f32 %v1006, %v1006
  %v1185 = vmul.f32 %v1011, %v1011
  %v1186 = vmul.f32 %v1016, %v1016
  %v1187 = vmul.f32 %v1021, %v1021
  %v1188 = vmul.f32 %v1026, %v1026
  %v1189 = vmul.f32 %v1031, %v1031
  %v1190 = vmul.f32 %v1036, %v1036
  %v1191 = vmul.f32 %v1041, %v1041
  %v1192 = vmul.f32 %v1046, %v1046
  %v1193 = vmul.f32 %v1051, %v1051
  %v1194 = vmul.f32 %v1056, %v1056
  %v1195 = vmul.f32 %v1061, %v1061
  %v1196 = vmul.f32 %v1066, %v1066
  %v1197 = vmul.f32 %v1071, %v1071
  %v1198 = vmul.f32 %v1076, %v1076
  %v1199 = vmul.f32 %v1081, %v1081
  %v1200 = vmul.f32 %v1086, %v1086
  %v1201 = vadd.f32 %v1089, %v1090
  %v1202 = vadd.f32 %v1201, %v1091
  %v1203 = vadd.f32 %v1202, %v1092
  %v1204 = vadd.f32 %v1203, %v1093
  %v1205 = vadd.f32 %v1204, %v1094
  %v1206 = vadd.f32 %v1205, %v1095
  %v1207 = vadd.f32 %v1206, %v1096
  %v1208 = vadd.f32 %v1207, %v1097
  %v1209 = vadd.f32 %v1208, %v1098
  %v1210 = vadd.f32 %v1209, %v1099
  %v1211 = vadd.f32 %v1210, %v1100
  %v1212 = vadd.f32 %v1211, %v1101
  %v1213 = vadd.f32 %v1212, %v1102
  %v1214 = vadd.f32 %v1213, %v1103
  %v1215 = vadd.f32 %v1214, %v1104
  %v1216 = vadd.f32 %v1215, %v1105
  %v1217 = vadd.f32 %v1216, %v1106
  %v1218 = vadd.f32 %v1217, %v1107
  %v1219 = vadd.f32 %v1218, %v1108
  %v1220 = vadd.f32 %v1219, %v1109
  %v1221 = vadd.f32 %v1220, %v1110
  %v1222 = vadd.f32 %v1221, %v1111
  %v1223 = vadd.f32 %v1222, %v1112
  %v1224 = vadd.f32 %v1223, %v1113
  %v1225 = vadd.f32 %v1224, %v1114
  %v1226 = vadd.f32 %v1225, %v1115
  %v1227 = vadd.f32 %v1226, %v1116
  %v1228 = vadd.f32 %v1227, %v1117
  %v1229 = vadd.f32 %v1228, %v1118
  %v1230 = vadd.f32 %v1229, %v1119
  %v1231 = vadd.f32 %v1230, %v1120
  %v1232 = vadd.f32 %v1231, %v1121
  %v1233 = vadd.f32 %v1232, %v1122
  %v1234 = vadd.f32 %v1233, %v1123
  %v1235 = vadd.f32 %v1234, %v1124
  %v1236 = vadd.f32 %v1235, %v1125
  %v1237 = vadd.f32 %v1236, %v1126
  %v1238 = vadd.f32 %v1237, %v1127
  %v1239 = vadd.f32 %v1238, %v1128
  %v1240 = vadd.f32 %v1239, %v1129
  %v1241 = vadd.f32 %v1240, %v1130
  %v1242 = vadd.f32 %v1241, %v1131
  %v1243 = vadd.f32 %v1242, %v1132
  %v1244 = vadd.f32 %v1243, %v1133
  %v1245 = vadd.f32 %v1244, %v1134
  %v1246 = vadd.f32 %v1245, %v1135
  %v1247 = vadd.f32 %v1246, %v1136
  %v1248 = vadd.f32 %v1247, %v1137
  %v1249 = vadd.f32 %v1248, %v1138
  %v1250 = vadd.f32 %v1249, %v1139
  %v1251 = vadd.f32 %v1250, %v1140
  %v1252 = vadd.f32 %v1251, %v1141
  %v1253 = vadd.f32 %v1252, %v1142
  %v1254 = vadd.f32 %v1253, %v1143
  %v1255 = vadd.f32 %v1254, %v1144
  %v1256 = vadd.f32 %v1255, %v1145
  %v1257 = vadd.f32 %v1256, %v1146
  %v1258 = vadd.f32 %v1257, %v1147
  %v1259 = vadd.f32 %v1258, %v1148
  %v1260 = vadd.f32 %v1259, %v1149
  %v1261 = vadd.f32 %v1260, %v1150
  %v1262 = vadd.f32 %v1261, %v1151
  %v1263 = vadd.f32 %v1262, %v1152
  %v1264 = vadd.f32 %v1263, %v1153
  %v1265 = vadd.f32 %v1264, %v1154
  %v1266 = vadd.f32 %v1265, %v1155
  %v1267 = vadd.f32 %v1266, %v1156
  %v1268 = vadd.f32 %v1267, %v1157
  %v1269 = vadd.f32 %v1268, %v1158
  %v1270 = vadd.f32 %v1269, %v1159
  %v1271 = vadd.f32 %v1270, %v1160
  %v1272 = vadd.f32 %v1271, %v1161
  %v1273 = vadd.f32 %v1272, %v1162
  %v1274 = vadd.f32 %v1273, %v1163
  %v1275 = vadd.f32 %v1274, %v1164
  %v1276 = vadd.f32 %v1275, %v1165
  %v1277 = vadd.f32 %v1276, %v1166
  %v1278 = vadd.f32 %v1277, %v1167
  %v1279 = vadd.f32 %v1278, %v1168
  %v1280 = vadd.f32 %v1279, %v1169
  %v1281 = vadd.f32 %v1280, %v1170
  %v1282 = vadd.f32 %v1281, %v1171
  %v1283 = vadd.f32 %v1282, %v1172
  %v1284 = vadd.f32 %v1283, %v1173
  %v1285 = vadd.f32 %v1284, %v1174
  %v1286 = vadd.f32 %v1285, %v1175
  %v1287 = vadd.f32 %v1286, %v1176
  %v1288 = vadd.f32 %v1287, %v1177
  %v1289 = vadd.f32 %v1288, %v1178
  %v1290 = vadd.f32 %v1289, %v1179
  %v1291 = vadd.f32 %v1290, %v1180
  %v1292 = vadd.f32 %v1291, %v1181
  %v1293 = vadd.f32 %v1292, %v1182
  %v1294 = vadd.f32 %v1293, %v1183
  %v1295 = vadd.f32 %v1294, %v1184
  %v1296 = vadd.f32 %v1295, %v1185
  %v1297 = vadd.f32 %v1296, %v1186
  %v1298 = vadd.f32 %v1297, %v1187
  %v1299 = vadd.f32 %v1298, %v1188
  %v1300 = vadd.f32 %v1299, %v1189
  %v1301 = vadd.f32 %v1300, %v1190
  %v1302 = vadd.f32 %v1301, %v1191
  %v1303 = vadd.f32 %v1302, %v1192
  %v1304 = vadd.f32 %v1303, %v1193
  %v1305 = vadd.f32 %v1304, %v1194
  %v1306 = vadd.f32 %v1305, %v1195
  %v1307 = vadd.f32 %v1306, %v1196
  %v1308 = vadd.f32 %v1307, %v1197
  %v1309 = vadd.f32 %v1308, %v1198
  %v1310 = vadd.f32 %v1309, %v1199
  %v1311 = vadd.f32 %v1310, %v1200
  %v1312 = vrot.slane %v1311, 4
  %v1313 = vadd.f32 %v1311, %v1312
  %v1314 = vrot.slane %v1313, 2
  %v1315 = vadd.f32 %v1313, %v1314
  %v1316 = vrot.slane %v1315, 1
  %v1317 = vadd.f32 %v1315, %v1316
  %1318 = vst [vmem:[%s2] sm:$0x1] %v1317
  // Predicated region
  $region10: #{up_trans_add.2} parent=0 // pred_check
    _
  $region11: #{up_trans_add.2} parent=0 // pred_check_branch
    %1320 = sbr.rel (0) target = $region13
  $region12: #{up_trans_add.2} parent=0 // pred_region
    _
  $region13: #{up_trans_add.2} parent=0 // pred_fallthru
    _
  // Predicated region
  $region14: #{up_trans_add.2} parent=0 // pred_check
    _
  $region15: #{up_trans_add.2} parent=0 // pred_check_branch
    %1322 = sbr.rel (0) target = $region17
  $region16: #{up_trans_add.2} parent=0 // pred_region
    _
  $region17: #{up_trans_add.2} parent=0 // pred_fallthru
    _

// kernel: up_trans_add.3
$region0: #{up_trans_add.3}
  #allocation0 [shape = 'u32[]', space=smem, size = 0x4, offset = 0x4, fixed_abs, tag = 'smem constant byte address 0x4 - core index']
  #allocation1 [shape = 'u32[144,128]{1,0:T(1,128)}', space=vmem, size = 0x12000, scoped, tag = 'internal scratch']
  %s0 = inlined_call_operand.vmem [shape: f32[896,32], index: 0, kind: input, shape index: {}]
  %s1 = inlined_call_operand.vmem [shape: f32[32,128], index: 1, kind: input, shape index: {}]
  %s2 = inlined_call_operand.vmem [shape: f32[1,128], index: 2, kind: input, shape index: {}]
  %s3 = inlined_call_operand.vmem [shape: f32[1,128], index: 3, kind: input, shape index: {}]
  %s4 = inlined_call_operand.vmem [shape: f32[896,128], index: 4, kind: output, shape index: {}]
  %s5 = sld [smem:[#allocation0]]
  $region26: #{up_trans_add.3} parent=0
    _
  %s7 = ssub.s32 1, %s5
  %s8 = scalar_select 0, %s7, %s5
  // Predicated region
  $region2: #{up_trans_add.3} parent=0 // pred_check
    _
  $region3: #{up_trans_add.3} parent=0 // pred_check_branch
    %10 = sbr.rel (0) target = $region5
  $region4: #{up_trans_add.3} parent=0 // pred_region
    _
  $region5: #{up_trans_add.3} parent=0 // pred_fallthru
    _
  // Predicated region
  $region6: #{up_trans_add.3} parent=0 // pred_check
    _
  $region7: #{up_trans_add.3} parent=0 // pred_check_branch
    %12 = sbr.rel (0) target = $region9
  $region8: #{up_trans_add.3} parent=0 // pred_region
    _
  $region9: #{up_trans_add.3} parent=0 // pred_fallthru
    _
  // Predicated region
  $region10: #{up_trans_add.3} parent=0 // pred_check
    _
  $region11: #{up_trans_add.3} parent=0 // pred_check_branch
    %14 = sbr.rel (0) target = $region13
  $region12: #{up_trans_add.3} parent=0 // pred_region
    _
  $region13: #{up_trans_add.3} parent=0 // pred_fallthru
    _
  // Predicated region
  $region14: #{up_trans_add.3} parent=0 // pred_check
    _
  $region15: #{up_trans_add.3} parent=0 // pred_check_branch
    %16 = sbr.rel (0) target = $region17
  $region16: #{up_trans_add.3} parent=0 // pred_region
    _
  $region17: #{up_trans_add.3} parent=0 // pred_fallthru
    _
  %v17 = vld [vmem:[%s0] sm:$0xff]
  %v18 = vld [vmem:[%s0 + $0x8] sm:$0xff]
  %v19 = vld [vmem:[%s0 + $0x10] sm:$0xff]
  %v20 = vld [vmem:[%s0 + $0x18] sm:$0xff]
  %v21 = vld [vmem:[%s0 + $0x20] sm:$0xff]
  %v22 = vld [vmem:[%s0 + $0x28] sm:$0xff]
  %v23 = vld [vmem:[%s0 + $0x30] sm:$0xff]
  %v24 = vld [vmem:[%s0 + $0x38] sm:$0xff]
  %v25 = vld [vmem:[%s0 + $0x40] sm:$0xff]
  %v26 = vld [vmem:[%s0 + $0x48] sm:$0xff]
  %v27 = vld [vmem:[%s0 + $0x50] sm:$0xff]
  %v28 = vld [vmem:[%s0 + $0x58] sm:$0xff]
  %v29 = vld [vmem:[%s0 + $0x60] sm:$0xff]
  %v30 = vld [vmem:[%s0 + $0x68] sm:$0xff]
  %v31 = vld [vmem:[%s0 + $0x70] sm:$0xff]
  %v32 = vld [vmem:[%s0 + $0x78] sm:$0xff]
  %v33 = vld [vmem:[%s0 + $0x80] sm:$0xff]
  %v34 = vld [vmem:[%s0 + $0x88] sm:$0xff]
  %v35 = vld [vmem:[%s0 + $0x90] sm:$0xff]
  %v36 = vld [vmem:[%s0 + $0x98] sm:$0xff]
  %v37 = vld [vmem:[%s0 + $0xa0] sm:$0xff]
  %v38 = vld [vmem:[%s0 + $0xa8] sm:$0xff]
  %v39 = vld [vmem:[%s0 + $0xb0] sm:$0xff]
  %v40 = vld [vmem:[%s0 + $0xb8] sm:$0xff]
  %v41 = vld [vmem:[%s0 + $0xc0] sm:$0xff]
  %v42 = vld [vmem:[%s0 + $0xc8] sm:$0xff]
  %v43 = vld [vmem:[%s0 + $0xd0] sm:$0xff]
  %v44 = vld [vmem:[%s0 + $0xd8] sm:$0xff]
  %v45 = vld [vmem:[%s0 + $0xe0] sm:$0xff]
  %v46 = vld [vmem:[%s0 + $0xe8] sm:$0xff]
  %v47 = vld [vmem:[%s0 + $0xf0] sm:$0xff]
  %v48 = vld [vmem:[%s0 + $0xf8] sm:$0xff]
  %v49 = vld [vmem:[%s0 + $0x100] sm:$0xff]
  %v50 = vld [vmem:[%s0 + $0x108] sm:$0xff]
  %v51 = vld [vmem:[%s0 + $0x110] sm:$0xff]
  %v52 = vld [vmem:[%s0 + $0x118] sm:$0xff]
  %v53 = vld [vmem:[%s0 + $0x120] sm:$0xff]
  %v54 = vld [vmem:[%s0 + $0x128] sm:$0xff]
  %v55 = vld [vmem:[%s0 + $0x130] sm:$0xff]
  %v56 = vld [vmem:[%s0 + $0x138] sm:$0xff]
  %v57 = vld [vmem:[%s0 + $0x140] sm:$0xff]
  %v58 = vld [vmem:[%s0 + $0x148] sm:$0xff]
  %v59 = vld [vmem:[%s0 + $0x150] sm:$0xff]
  %v60 = vld [vmem:[%s0 + $0x158] sm:$0xff]
  %v61 = vld [vmem:[%s0 + $0x160] sm:$0xff]
  %v62 = vld [vmem:[%s0 + $0x168] sm:$0xff]
  %v63 = vld [vmem:[%s0 + $0x170] sm:$0xff]
  %v64 = vld [vmem:[%s0 + $0x178] sm:$0xff]
  %v65 = vld [vmem:[%s0 + $0x180] sm:$0xff]
  %v66 = vld [vmem:[%s0 + $0x188] sm:$0xff]
  %v67 = vld [vmem:[%s0 + $0x190] sm:$0xff]
  %v68 = vld [vmem:[%s0 + $0x198] sm:$0xff]
  %v69 = vld [vmem:[%s0 + $0x1a0] sm:$0xff]
  %v70 = vld [vmem:[%s0 + $0x1a8] sm:$0xff]
  %v71 = vld [vmem:[%s0 + $0x1b0] sm:$0xff]
  %v72 = vld [vmem:[%s0 + $0x1b8] sm:$0xff]
  %v73 = vld [vmem:[%s0 + $0x1c0] sm:$0xff]
  %v74 = vld [vmem:[%s0 + $0x1c8] sm:$0xff]
  %v75 = vld [vmem:[%s0 + $0x1d0] sm:$0xff]
  %v76 = vld [vmem:[%s0 + $0x1d8] sm:$0xff]
  %v77 = vld [vmem:[%s0 + $0x1e0] sm:$0xff]
  %v78 = vld [vmem:[%s0 + $0x1e8] sm:$0xff]
  %v79 = vld [vmem:[%s0 + $0x1f0] sm:$0xff]
  %v80 = vld [vmem:[%s0 + $0x1f8] sm:$0xff]
  %v81 = vld [vmem:[%s0 + $0x200] sm:$0xff]
  %v82 = vld [vmem:[%s0 + $0x208] sm:$0xff]
  %v83 = vld [vmem:[%s0 + $0x210] sm:$0xff]
  %v84 = vld [vmem:[%s0 + $0x218] sm:$0xff]
  %v85 = vld [vmem:[%s0 + $0x220] sm:$0xff]
  %v86 = vld [vmem:[%s0 + $0x228] sm:$0xff]
  %v87 = vld [vmem:[%s0 + $0x230] sm:$0xff]
  %v88 = vld [vmem:[%s0 + $0x238] sm:$0xff]
  %v89 = vld [vmem:[%s0 + $0x240] sm:$0xff]
  %v90 = vld [vmem:[%s0 + $0x248] sm:$0xff]
  %v91 = vld [vmem:[%s0 + $0x250] sm:$0xff]
  %v92 = vld [vmem:[%s0 + $0x258] sm:$0xff]
  %v93 = vld [vmem:[%s0 + $0x260] sm:$0xff]
  %v94 = vld [vmem:[%s0 + $0x268] sm:$0xff]
  %v95 = vld [vmem:[%s0 + $0x270] sm:$0xff]
  %v96 = vld [vmem:[%s0 + $0x278] sm:$0xff]
  %v97 = vld [vmem:[%s0 + $0x280] sm:$0xff]
  %v98 = vld [vmem:[%s0 + $0x288] sm:$0xff]
  %v99 = vld [vmem:[%s0 + $0x290] sm:$0xff]
  %v100 = vld [vmem:[%s0 + $0x298] sm:$0xff]
  %v101 = vld [vmem:[%s0 + $0x2a0] sm:$0xff]
  %v102 = vld [vmem:[%s0 + $0x2a8] sm:$0xff]
  %v103 = vld [vmem:[%s0 + $0x2b0] sm:$0xff]
  %v104 = vld [vmem:[%s0 + $0x2b8] sm:$0xff]
  %v105 = vld [vmem:[%s0 + $0x2c0] sm:$0xff]
  %v106 = vld [vmem:[%s0 + $0x2c8] sm:$0xff]
  %v107 = vld [vmem:[%s0 + $0x2d0] sm:$0xff]
  %v108 = vld [vmem:[%s0 + $0x2d8] sm:$0xff]
  %v109 = vld [vmem:[%s0 + $0x2e0] sm:$0xff]
  %v110 = vld [vmem:[%s0 + $0x2e8] sm:$0xff]
  %v111 = vld [vmem:[%s0 + $0x2f0] sm:$0xff]
  %v112 = vld [vmem:[%s0 + $0x2f8] sm:$0xff]
  %v113 = vld [vmem:[%s0 + $0x300] sm:$0xff]
  %v114 = vld [vmem:[%s0 + $0x308] sm:$0xff]
  %v115 = vld [vmem:[%s0 + $0x310] sm:$0xff]
  %v116 = vld [vmem:[%s0 + $0x318] sm:$0xff]
  %v117 = vld [vmem:[%s0 + $0x320] sm:$0xff]
  %v118 = vld [vmem:[%s0 + $0x328] sm:$0xff]
  %v119 = vld [vmem:[%s0 + $0x330] sm:$0xff]
  %v120 = vld [vmem:[%s0 + $0x338] sm:$0xff]
  %v121 = vld [vmem:[%s0 + $0x340] sm:$0xff]
  %v122 = vld [vmem:[%s0 + $0x348] sm:$0xff]
  %v123 = vld [vmem:[%s0 + $0x350] sm:$0xff]
  %v124 = vld [vmem:[%s0 + $0x358] sm:$0xff]
  %v125 = vld [vmem:[%s0 + $0x360] sm:$0xff]
  %v126 = vld [vmem:[%s0 + $0x368] sm:$0xff]
  %v127 = vld [vmem:[%s0 + $0x370] sm:$0xff]
  %v128 = vld [vmem:[%s0 + $0x378] sm:$0xff]
  %v129 = vld [vmem:[%s1] sm:$0xff]
  %v130 = vld [vmem:[%s1 + $0x8] sm:$0xff]
  %v131 = vld [vmem:[%s1 + $0x10] sm:$0xff]
  %v132 = vld [vmem:[%s1 + $0x18] sm:$0xff]
  %v133 = vld [vmem:[%s2] sm:$0x1]
  %v135 = vlaneseq
  %v136 = vshrl.u32 %v135, 7
  %v137 = vsub.s32 0, %v136
  %v138 = vrot.slane %v133, %v137
  %vm140 = vcmask 261120
  %v142 = vsel %vm140, %v17, 0
  %v145 = vsel %vm140, %v18, 0
  %v148 = vsel %vm140, %v19, 0
  %v151 = vsel %vm140, %v20, 0
  %v154 = vsel %vm140, %v21, 0
  %v157 = vsel %vm140, %v22, 0
  %v160 = vsel %vm140, %v23, 0
  %v163 = vsel %vm140, %v24, 0
  %v166 = vsel %vm140, %v25, 0
  %v169 = vsel %vm140, %v26, 0
  %v172 = vsel %vm140, %v27, 0
  %v175 = vsel %vm140, %v28, 0
  %v178 = vsel %vm140, %v29, 0
  %v181 = vsel %vm140, %v30, 0
  %v184 = vsel %vm140, %v31, 0
  %v187 = vsel %vm140, %v32, 0
  %v190 = vsel %vm140, %v33, 0
  %v193 = vsel %vm140, %v34, 0
  %v196 = vsel %vm140, %v35, 0
  %v199 = vsel %vm140, %v36, 0
  %v202 = vsel %vm140, %v37, 0
  %v205 = vsel %vm140, %v38, 0
  %v208 = vsel %vm140, %v39, 0
  %v211 = vsel %vm140, %v40, 0
  %v214 = vsel %vm140, %v41, 0
  %v217 = vsel %vm140, %v42, 0
  %v220 = vsel %vm140, %v43, 0
  %v223 = vsel %vm140, %v44, 0
  %v226 = vsel %vm140, %v45, 0
  %v229 = vsel %vm140, %v46, 0
  %v232 = vsel %vm140, %v47, 0
  %v235 = vsel %vm140, %v48, 0
  %v238 = vsel %vm140, %v49, 0
  %v241 = vsel %vm140, %v50, 0
  %v244 = vsel %vm140, %v51, 0
  %v247 = vsel %vm140, %v52, 0
  %v250 = vsel %vm140, %v53, 0
  %v253 = vsel %vm140, %v54, 0
  %v256 = vsel %vm140, %v55, 0
  %v259 = vsel %vm140, %v56, 0
  %v262 = vsel %vm140, %v57, 0
  %v265 = vsel %vm140, %v58, 0
  %v268 = vsel %vm140, %v59, 0
  %v271 = vsel %vm140, %v60, 0
  %v274 = vsel %vm140, %v61, 0
  %v277 = vsel %vm140, %v62, 0
  %v280 = vsel %vm140, %v63, 0
  %v283 = vsel %vm140, %v64, 0
  %v286 = vsel %vm140, %v65, 0
  %v289 = vsel %vm140, %v66, 0
  %v292 = vsel %vm140, %v67, 0
  %v295 = vsel %vm140, %v68, 0
  %v298 = vsel %vm140, %v69, 0
  %v301 = vsel %vm140, %v70, 0
  %v304 = vsel %vm140, %v71, 0
  %v307 = vsel %vm140, %v72, 0
  %v310 = vsel %vm140, %v73, 0
  %v313 = vsel %vm140, %v74, 0
  %v316 = vsel %vm140, %v75, 0
  %v319 = vsel %vm140, %v76, 0
  %v322 = vsel %vm140, %v77, 0
  %v325 = vsel %vm140, %v78, 0
  %v328 = vsel %vm140, %v79, 0
  %v331 = vsel %vm140, %v80, 0
  %v334 = vsel %vm140, %v81, 0
  %v337 = vsel %vm140, %v82, 0
  %v340 = vsel %vm140, %v83, 0
  %v343 = vsel %vm140, %v84, 0
  %v346 = vsel %vm140, %v85, 0
  %v349 = vsel %vm140, %v86, 0
  %v352 = vsel %vm140, %v87, 0
  %v355 = vsel %vm140, %v88, 0
  %v358 = vsel %vm140, %v89, 0
  %v361 = vsel %vm140, %v90, 0
  %v364 = vsel %vm140, %v91, 0
  %v367 = vsel %vm140, %v92, 0
  %v370 = vsel %vm140, %v93, 0
  %v373 = vsel %vm140, %v94, 0
  %v376 = vsel %vm140, %v95, 0
  %v379 = vsel %vm140, %v96, 0
  %v382 = vsel %vm140, %v97, 0
  %v385 = vsel %vm140, %v98, 0
  %v388 = vsel %vm140, %v99, 0
  %v391 = vsel %vm140, %v100, 0
  %v394 = vsel %vm140, %v101, 0
  %v397 = vsel %vm140, %v102, 0
  %v400 = vsel %vm140, %v103, 0
  %v403 = vsel %vm140, %v104, 0
  %v406 = vsel %vm140, %v105, 0
  %v409 = vsel %vm140, %v106, 0
  %v412 = vsel %vm140, %v107, 0
  %v415 = vsel %vm140, %v108, 0
  %v418 = vsel %vm140, %v109, 0
  %v421 = vsel %vm140, %v110, 0
  %v424 = vsel %vm140, %v111, 0
  %v427 = vsel %vm140, %v112, 0
  %v430 = vsel %vm140, %v113, 0
  %v433 = vsel %vm140, %v114, 0
  %v436 = vsel %vm140, %v115, 0
  %v439 = vsel %vm140, %v116, 0
  %v442 = vsel %vm140, %v117, 0
  %v445 = vsel %vm140, %v118, 0
  %v448 = vsel %vm140, %v119, 0
  %v451 = vsel %vm140, %v120, 0
  %v454 = vsel %vm140, %v121, 0
  %v457 = vsel %vm140, %v122, 0
  %v460 = vsel %vm140, %v123, 0
  %v463 = vsel %vm140, %v124, 0
  %v466 = vsel %vm140, %v125, 0
  %v469 = vsel %vm140, %v126, 0
  %v472 = vsel %vm140, %v127, 0
  %v475 = vsel %vm140, %v128, 0
  %477 = vmatprep.subr.mxu0 0.0
  %478 = vmatpush1.msra.mxu0 0.0
  %479 = vmatprep.subr.mxu0 0.0
  %480 = vmatpush1.msra.mxu0 0.0
  %481 = vmatprep.subr.mxu0 0.0
  %482 = vmatpush1.msra.mxu0 0.0
  %483 = vmatprep.subr.mxu0 0.0
  %484 = vmatpush1.msra.mxu0 0.0
  %485 = vmatprep.subr.mxu0 0.0
  %486 = vmatpush1.msra.mxu0 0.0
  %487 = vmatprep.subr.mxu0 0.0
  %488 = vmatpush1.msra.mxu0 0.0
  %489 = vmatprep.subr.mxu0 0.0
  %490 = vmatpush1.msra.mxu0 0.0
  %491 = vmatprep.subr.mxu0 0.0
  %492 = vmatpush1.msra.mxu0 0.0
  %493 = vmatprep.subr.mxu0 0.0
  %494 = vmatpush1.msra.mxu0 0.0
  %495 = vmatprep.subr.mxu0 0.0
  %496 = vmatpush1.msra.mxu0 0.0
  %497 = vmatprep.subr.mxu0 0.0
  %498 = vmatpush1.msra.mxu0 0.0
  %499 = vmatprep.subr.mxu0 0.0
  %500 = vmatpush1.msra.mxu0 0.0
  %501 = vmatprep.subr.mxu0 0.0
  %502 = vmatpush1.msra.mxu0 %v132
  %503 = vmatprep.subr.mxu0 0.0
  %504 = vmatpush1.msra.mxu0 %v131
  %505 = vmatprep.subr.mxu0 0.0
  %506 = vmatpush1.msra.mxu0 %v130
  %507 = vmatprep.subr.mxu0 0.0
  %508 = vmatpush1.msra.mxu0 %v129
  %509 = vmatprep.subr.mxu0 0.0
  %510 = vmatpush2.msra.mxu0 0.0
  %511 = vmatprep.subr.mxu0 0.0
  %512 = vmatpush2.msra.mxu0 0.0
  %513 = vmatprep.subr.mxu0 0.0
  %514 = vmatpush2.msra.mxu0 0.0
  %515 = vmatprep.subr.mxu0 0.0
  %516 = vmatpush2.msra.mxu0 0.0
  %517 = vmatprep.subr.mxu0 0.0
  %518 = vmatpush2.msra.mxu0 0.0
  %519 = vmatprep.subr.mxu0 0.0
  %520 = vmatpush2.msra.mxu0 0.0
  %521 = vmatprep.subr.mxu0 0.0
  %522 = vmatpush2.msra.mxu0 0.0
  %523 = vmatprep.subr.mxu0 0.0
  %524 = vmatpush2.msra.mxu0 0.0
  %525 = vmatprep.subr.mxu0 0.0
  %526 = vmatpush2.msra.mxu0 0.0
  %527 = vmatprep.subr.mxu0 0.0
  %528 = vmatpush2.msra.mxu0 0.0
  %529 = vmatprep.subr.mxu0 0.0
  %530 = vmatpush2.msra.mxu0 0.0
  %531 = vmatprep.subr.mxu0 0.0
  %532 = vmatpush2.msra.mxu0 0.0
  %533 = vmatprep.subr.mxu0 0.0
  %534 = vmatpush2.msra.mxu0 0.0
  %535 = vmatprep.subr.mxu0 0.0
  %536 = vmatpush2.msra.mxu0 0.0
  %537 = vmatprep.subr.mxu0 0.0
  %538 = vmatpush2.msra.mxu0 0.0
  %539 = vmatprep.subr.mxu0 0.0
  %540 = vmatpush2.msra.mxu0 0.0
  %541 = vmatprep.mubr.f32.mxu0 0.0
  %542 = vmatmul.mubr.f32.gmra.mxu0 %v142
  %v543 = vpop.f32.mrf.mxu0
  %v544 = vadd.f32 %v138, %v543
  %v545 = vpop.f32.mrf.mxu0
  %546 = vmatprep.mubr.f32.mxu0 0.0
  %547 = vmatmul.mubr.f32.gmra.mxu0 %v145
  %v548 = vpop.f32.mrf.mxu0
  %v549 = vadd.f32 %v138, %v548
  %v550 = vpop.f32.mrf.mxu0
  %551 = vmatprep.mubr.f32.mxu0 0.0
  %552 = vmatmul.mubr.f32.gmra.mxu0 %v148
  %v553 = vpop.f32.mrf.mxu0
  %v554 = vadd.f32 %v138, %v553
  %v555 = vpop.f32.mrf.mxu0
  %556 = vmatprep.mubr.f32.mxu0 0.0
  %557 = vmatmul.mubr.f32.gmra.mxu0 %v151
  %v558 = vpop.f32.mrf.mxu0
  %v559 = vadd.f32 %v138, %v558
  %v560 = vpop.f32.mrf.mxu0
  %561 = vmatprep.mubr.f32.mxu0 0.0
  %562 = vmatmul.mubr.f32.gmra.mxu0 %v154
  %v563 = vpop.f32.mrf.mxu0
  %v564 = vadd.f32 %v138, %v563
  %v565 = vpop.f32.mrf.mxu0
  %566 = vmatprep.mubr.f32.mxu0 0.0
  %567 = vmatmul.mubr.f32.gmra.mxu0 %v157
  %v568 = vpop.f32.mrf.mxu0
  %v569 = vadd.f32 %v138, %v568
  %v570 = vpop.f32.mrf.mxu0
  %571 = vmatprep.mubr.f32.mxu0 0.0
  %572 = vmatmul.mubr.f32.gmra.mxu0 %v160
  %v573 = vpop.f32.mrf.mxu0
  %v574 = vadd.f32 %v138, %v573
  %v575 = vpop.f32.mrf.mxu0
  %576 = vmatprep.mubr.f32.mxu0 0.0
  %577 = vmatmul.mubr.f32.gmra.mxu0 %v163
  %v578 = vpop.f32.mrf.mxu0
  %v579 = vadd.f32 %v138, %v578
  %v580 = vpop.f32.mrf.mxu0
  %581 = vmatprep.mubr.f32.mxu0 0.0
  %582 = vmatmul.mubr.f32.gmra.mxu0 %v166
  %v583 = vpop.f32.mrf.mxu0
  %v584 = vadd.f32 %v138, %v583
  %v585 = vpop.f32.mrf.mxu0
  %586 = vmatprep.mubr.f32.mxu0 0.0
  %587 = vmatmul.mubr.f32.gmra.mxu0 %v169
  %v588 = vpop.f32.mrf.mxu0
  %v589 = vadd.f32 %v138, %v588
  %v590 = vpop.f32.mrf.mxu0
  %591 = vmatprep.mubr.f32.mxu0 0.0
  %592 = vmatmul.mubr.f32.gmra.mxu0 %v172
  %v593 = vpop.f32.mrf.mxu0
  %v594 = vadd.f32 %v138, %v593
  %v595 = vpop.f32.mrf.mxu0
  %596 = vmatprep.mubr.f32.mxu0 0.0
  %597 = vmatmul.mubr.f32.gmra.mxu0 %v175
  %v598 = vpop.f32.mrf.mxu0
  %v599 = vadd.f32 %v138, %v598
  %v600 = vpop.f32.mrf.mxu0
  %601 = vmatprep.mubr.f32.mxu0 0.0
  %602 = vmatmul.mubr.f32.gmra.mxu0 %v178
  %v603 = vpop.f32.mrf.mxu0
  %v604 = vadd.f32 %v138, %v603
  %v605 = vpop.f32.mrf.mxu0
  %606 = vmatprep.mubr.f32.mxu0 0.0
  %607 = vmatmul.mubr.f32.gmra.mxu0 %v181
  %v608 = vpop.f32.mrf.mxu0
  %v609 = vadd.f32 %v138, %v608
  %v610 = vpop.f32.mrf.mxu0
  %611 = vmatprep.mubr.f32.mxu0 0.0
  %612 = vmatmul.mubr.f32.gmra.mxu0 %v184
  %v613 = vpop.f32.mrf.mxu0
  %v614 = vadd.f32 %v138, %v613
  %v615 = vpop.f32.mrf.mxu0
  %616 = vmatprep.mubr.f32.mxu0 0.0
  %617 = vmatmul.mubr.f32.gmra.mxu0 %v187
  %v618 = vpop.f32.mrf.mxu0
  %v619 = vadd.f32 %v138, %v618
  %v620 = vpop.f32.mrf.mxu0
  %621 = vmatprep.mubr.f32.mxu0 0.0
  %622 = vmatmul.mubr.f32.gmra.mxu0 %v190
  %v623 = vpop.f32.mrf.mxu0
  %v624 = vadd.f32 %v138, %v623
  %v625 = vpop.f32.mrf.mxu0
  %626 = vmatprep.mubr.f32.mxu0 0.0
  %627 = vmatmul.mubr.f32.gmra.mxu0 %v193
  %v628 = vpop.f32.mrf.mxu0
  %v629 = vadd.f32 %v138, %v628
  %v630 = vpop.f32.mrf.mxu0
  %631 = vmatprep.mubr.f32.mxu0 0.0
  %632 = vmatmul.mubr.f32.gmra.mxu0 %v196
  %v633 = vpop.f32.mrf.mxu0
  %v634 = vadd.f32 %v138, %v633
  %v635 = vpop.f32.mrf.mxu0
  %636 = vmatprep.mubr.f32.mxu0 0.0
  %637 = vmatmul.mubr.f32.gmra.mxu0 %v199
  %v638 = vpop.f32.mrf.mxu0
  %v639 = vadd.f32 %v138, %v638
  %v640 = vpop.f32.mrf.mxu0
  %641 = vmatprep.mubr.f32.mxu0 0.0
  %642 = vmatmul.mubr.f32.gmra.mxu0 %v202
  %v643 = vpop.f32.mrf.mxu0
  %v644 = vadd.f32 %v138, %v643
  %v645 = vpop.f32.mrf.mxu0
  %646 = vmatprep.mubr.f32.mxu0 0.0
  %647 = vmatmul.mubr.f32.gmra.mxu0 %v205
  %v648 = vpop.f32.mrf.mxu0
  %v649 = vadd.f32 %v138, %v648
  %v650 = vpop.f32.mrf.mxu0
  %651 = vmatprep.mubr.f32.mxu0 0.0
  %652 = vmatmul.mubr.f32.gmra.mxu0 %v208
  %v653 = vpop.f32.mrf.mxu0
  %v654 = vadd.f32 %v138, %v653
  %v655 = vpop.f32.mrf.mxu0
  %656 = vmatprep.mubr.f32.mxu0 0.0
  %657 = vmatmul.mubr.f32.gmra.mxu0 %v211
  %v658 = vpop.f32.mrf.mxu0
  %v659 = vadd.f32 %v138, %v658
  %v660 = vpop.f32.mrf.mxu0
  %661 = vmatprep.mubr.f32.mxu0 0.0
  %662 = vmatmul.mubr.f32.gmra.mxu0 %v214
  %v663 = vpop.f32.mrf.mxu0
  %v664 = vadd.f32 %v138, %v663
  %v665 = vpop.f32.mrf.mxu0
  %666 = vmatprep.mubr.f32.mxu0 0.0
  %667 = vmatmul.mubr.f32.gmra.mxu0 %v217
  %v668 = vpop.f32.mrf.mxu0
  %v669 = vadd.f32 %v138, %v668
  %v670 = vpop.f32.mrf.mxu0
  %671 = vmatprep.mubr.f32.mxu0 0.0
  %672 = vmatmul.mubr.f32.gmra.mxu0 %v220
  %v673 = vpop.f32.mrf.mxu0
  %v674 = vadd.f32 %v138, %v673
  %v675 = vpop.f32.mrf.mxu0
  %676 = vmatprep.mubr.f32.mxu0 0.0
  %677 = vmatmul.mubr.f32.gmra.mxu0 %v223
  %v678 = vpop.f32.mrf.mxu0
  %v679 = vadd.f32 %v138, %v678
  %v680 = vpop.f32.mrf.mxu0
  %681 = vmatprep.mubr.f32.mxu0 0.0
  %682 = vmatmul.mubr.f32.gmra.mxu0 %v226
  %v683 = vpop.f32.mrf.mxu0
  %v684 = vadd.f32 %v138, %v683
  %v685 = vpop.f32.mrf.mxu0
  %686 = vmatprep.mubr.f32.mxu0 0.0
  %687 = vmatmul.mubr.f32.gmra.mxu0 %v229
  %v688 = vpop.f32.mrf.mxu0
  %v689 = vadd.f32 %v138, %v688
  %v690 = vpop.f32.mrf.mxu0
  %691 = vmatprep.mubr.f32.mxu0 0.0
  %692 = vmatmul.mubr.f32.gmra.mxu0 %v232
  %v693 = vpop.f32.mrf.mxu0
  %v694 = vadd.f32 %v138, %v693
  %v695 = vpop.f32.mrf.mxu0
  %696 = vmatprep.mubr.f32.mxu0 0.0
  %697 = vmatmul.mubr.f32.gmra.mxu0 %v235
  %v698 = vpop.f32.mrf.mxu0
  %v699 = vadd.f32 %v138, %v698
  %v700 = vpop.f32.mrf.mxu0
  %701 = vmatprep.mubr.f32.mxu0 0.0
  %702 = vmatmul.mubr.f32.gmra.mxu0 %v238
  %v703 = vpop.f32.mrf.mxu0
  %v704 = vadd.f32 %v138, %v703
  %v705 = vpop.f32.mrf.mxu0
  %706 = vmatprep.mubr.f32.mxu0 0.0
  %707 = vmatmul.mubr.f32.gmra.mxu0 %v241
  %v708 = vpop.f32.mrf.mxu0
  %v709 = vadd.f32 %v138, %v708
  %v710 = vpop.f32.mrf.mxu0
  %711 = vmatprep.mubr.f32.mxu0 0.0
  %712 = vmatmul.mubr.f32.gmra.mxu0 %v244
  %v713 = vpop.f32.mrf.mxu0
  %v714 = vadd.f32 %v138, %v713
  %v715 = vpop.f32.mrf.mxu0
  %716 = vmatprep.mubr.f32.mxu0 0.0
  %717 = vmatmul.mubr.f32.gmra.mxu0 %v247
  %v718 = vpop.f32.mrf.mxu0
  %v719 = vadd.f32 %v138, %v718
  %v720 = vpop.f32.mrf.mxu0
  %721 = vmatprep.mubr.f32.mxu0 0.0
  %722 = vmatmul.mubr.f32.gmra.mxu0 %v250
  %v723 = vpop.f32.mrf.mxu0
  %v724 = vadd.f32 %v138, %v723
  %v725 = vpop.f32.mrf.mxu0
  %726 = vmatprep.mubr.f32.mxu0 0.0
  %727 = vmatmul.mubr.f32.gmra.mxu0 %v253
  %v728 = vpop.f32.mrf.mxu0
  %v729 = vadd.f32 %v138, %v728
  %v730 = vpop.f32.mrf.mxu0
  %731 = vmatprep.mubr.f32.mxu0 0.0
  %732 = vmatmul.mubr.f32.gmra.mxu0 %v256
  %v733 = vpop.f32.mrf.mxu0
  %v734 = vadd.f32 %v138, %v733
  %v735 = vpop.f32.mrf.mxu0
  %736 = vmatprep.mubr.f32.mxu0 0.0
  %737 = vmatmul.mubr.f32.gmra.mxu0 %v259
  %v738 = vpop.f32.mrf.mxu0
  %v739 = vadd.f32 %v138, %v738
  %v740 = vpop.f32.mrf.mxu0
  %741 = vmatprep.mubr.f32.mxu0 0.0
  %742 = vmatmul.mubr.f32.gmra.mxu0 %v262
  %v743 = vpop.f32.mrf.mxu0
  %v744 = vadd.f32 %v138, %v743
  %v745 = vpop.f32.mrf.mxu0
  %746 = vmatprep.mubr.f32.mxu0 0.0
  %747 = vmatmul.mubr.f32.gmra.mxu0 %v265
  %v748 = vpop.f32.mrf.mxu0
  %v749 = vadd.f32 %v138, %v748
  %v750 = vpop.f32.mrf.mxu0
  %751 = vmatprep.mubr.f32.mxu0 0.0
  %752 = vmatmul.mubr.f32.gmra.mxu0 %v268
  %v753 = vpop.f32.mrf.mxu0
  %v754 = vadd.f32 %v138, %v753
  %v755 = vpop.f32.mrf.mxu0
  %756 = vmatprep.mubr.f32.mxu0 0.0
  %757 = vmatmul.mubr.f32.gmra.mxu0 %v271
  %v758 = vpop.f32.mrf.mxu0
  %v759 = vadd.f32 %v138, %v758
  %v760 = vpop.f32.mrf.mxu0
  %761 = vmatprep.mubr.f32.mxu0 0.0
  %762 = vmatmul.mubr.f32.gmra.mxu0 %v274
  %v763 = vpop.f32.mrf.mxu0
  %v764 = vadd.f32 %v138, %v763
  %v765 = vpop.f32.mrf.mxu0
  %766 = vmatprep.mubr.f32.mxu0 0.0
  %767 = vmatmul.mubr.f32.gmra.mxu0 %v277
  %v768 = vpop.f32.mrf.mxu0
  %v769 = vadd.f32 %v138, %v768
  %v770 = vpop.f32.mrf.mxu0
  %771 = vmatprep.mubr.f32.mxu0 0.0
  %772 = vmatmul.mubr.f32.gmra.mxu0 %v280
  %v773 = vpop.f32.mrf.mxu0
  %v774 = vadd.f32 %v138, %v773
  %v775 = vpop.f32.mrf.mxu0
  %776 = vmatprep.mubr.f32.mxu0 0.0
  %777 = vmatmul.mubr.f32.gmra.mxu0 %v283
  %v778 = vpop.f32.mrf.mxu0
  %v779 = vadd.f32 %v138, %v778
  %v780 = vpop.f32.mrf.mxu0
  %781 = vmatprep.mubr.f32.mxu0 0.0
  %782 = vmatmul.mubr.f32.gmra.mxu0 %v286
  %v783 = vpop.f32.mrf.mxu0
  %v784 = vadd.f32 %v138, %v783
  %v785 = vpop.f32.mrf.mxu0
  %786 = vmatprep.mubr.f32.mxu0 0.0
  %787 = vmatmul.mubr.f32.gmra.mxu0 %v289
  %v788 = vpop.f32.mrf.mxu0
  %v789 = vadd.f32 %v138, %v788
  %v790 = vpop.f32.mrf.mxu0
  %791 = vmatprep.mubr.f32.mxu0 0.0
  %792 = vmatmul.mubr.f32.gmra.mxu0 %v292
  %v793 = vpop.f32.mrf.mxu0
  %v794 = vadd.f32 %v138, %v793
  %v795 = vpop.f32.mrf.mxu0
  %796 = vmatprep.mubr.f32.mxu0 0.0
  %797 = vmatmul.mubr.f32.gmra.mxu0 %v295
  %v798 = vpop.f32.mrf.mxu0
  %v799 = vadd.f32 %v138, %v798
  %v800 = vpop.f32.mrf.mxu0
  %801 = vmatprep.mubr.f32.mxu0 0.0
  %802 = vmatmul.mubr.f32.gmra.mxu0 %v298
  %v803 = vpop.f32.mrf.mxu0
  %v804 = vadd.f32 %v138, %v803
  %v805 = vpop.f32.mrf.mxu0
  %806 = vmatprep.mubr.f32.mxu0 0.0
  %807 = vmatmul.mubr.f32.gmra.mxu0 %v301
  %v808 = vpop.f32.mrf.mxu0
  %v809 = vadd.f32 %v138, %v808
  %v810 = vpop.f32.mrf.mxu0
  %811 = vmatprep.mubr.f32.mxu0 0.0
  %812 = vmatmul.mubr.f32.gmra.mxu0 %v304
  %v813 = vpop.f32.mrf.mxu0
  %v814 = vadd.f32 %v138, %v813
  %v815 = vpop.f32.mrf.mxu0
  %816 = vmatprep.mubr.f32.mxu0 0.0
  %817 = vmatmul.mubr.f32.gmra.mxu0 %v307
  %v818 = vpop.f32.mrf.mxu0
  %v819 = vadd.f32 %v138, %v818
  %v820 = vpop.f32.mrf.mxu0
  %821 = vmatprep.mubr.f32.mxu0 0.0
  %822 = vmatmul.mubr.f32.gmra.mxu0 %v310
  %v823 = vpop.f32.mrf.mxu0
  %v824 = vadd.f32 %v138, %v823
  %v825 = vpop.f32.mrf.mxu0
  %826 = vmatprep.mubr.f32.mxu0 0.0
  %827 = vmatmul.mubr.f32.gmra.mxu0 %v313
  %v828 = vpop.f32.mrf.mxu0
  %v829 = vadd.f32 %v138, %v828
  %v830 = vpop.f32.mrf.mxu0
  %831 = vmatprep.mubr.f32.mxu0 0.0
  %832 = vmatmul.mubr.f32.gmra.mxu0 %v316
  %v833 = vpop.f32.mrf.mxu0
  %v834 = vadd.f32 %v138, %v833
  %v835 = vpop.f32.mrf.mxu0
  %836 = vmatprep.mubr.f32.mxu0 0.0
  %837 = vmatmul.mubr.f32.gmra.mxu0 %v319
  %v838 = vpop.f32.mrf.mxu0
  %v839 = vadd.f32 %v138, %v838
  %v840 = vpop.f32.mrf.mxu0
  %841 = vmatprep.mubr.f32.mxu0 0.0
  %842 = vmatmul.mubr.f32.gmra.mxu0 %v322
  %v843 = vpop.f32.mrf.mxu0
  %v844 = vadd.f32 %v138, %v843
  %v845 = vpop.f32.mrf.mxu0
  %846 = vmatprep.mubr.f32.mxu0 0.0
  %847 = vmatmul.mubr.f32.gmra.mxu0 %v325
  %v848 = vpop.f32.mrf.mxu0
  %v849 = vadd.f32 %v138, %v848
  %v850 = vpop.f32.mrf.mxu0
  %851 = vmatprep.mubr.f32.mxu0 0.0
  %852 = vmatmul.mubr.f32.gmra.mxu0 %v328
  %v853 = vpop.f32.mrf.mxu0
  %v854 = vadd.f32 %v138, %v853
  %v855 = vpop.f32.mrf.mxu0
  %856 = vmatprep.mubr.f32.mxu0 0.0
  %857 = vmatmul.mubr.f32.gmra.mxu0 %v331
  %v858 = vpop.f32.mrf.mxu0
  %v859 = vadd.f32 %v138, %v858
  %v860 = vpop.f32.mrf.mxu0
  %861 = vmatprep.mubr.f32.mxu0 0.0
  %862 = vmatmul.mubr.f32.gmra.mxu0 %v334
  %v863 = vpop.f32.mrf.mxu0
  %v864 = vadd.f32 %v138, %v863
  %v865 = vpop.f32.mrf.mxu0
  %866 = vmatprep.mubr.f32.mxu0 0.0
  %867 = vmatmul.mubr.f32.gmra.mxu0 %v337
  %v868 = vpop.f32.mrf.mxu0
  %v869 = vadd.f32 %v138, %v868
  %v870 = vpop.f32.mrf.mxu0
  %871 = vmatprep.mubr.f32.mxu0 0.0
  %872 = vmatmul.mubr.f32.gmra.mxu0 %v340
  %v873 = vpop.f32.mrf.mxu0
  %v874 = vadd.f32 %v138, %v873
  %v875 = vpop.f32.mrf.mxu0
  %876 = vmatprep.mubr.f32.mxu0 0.0
  %877 = vmatmul.mubr.f32.gmra.mxu0 %v343
  %v878 = vpop.f32.mrf.mxu0
  %v879 = vadd.f32 %v138, %v878
  %v880 = vpop.f32.mrf.mxu0
  %881 = vmatprep.mubr.f32.mxu0 0.0
  %882 = vmatmul.mubr.f32.gmra.mxu0 %v346
  %v883 = vpop.f32.mrf.mxu0
  %v884 = vadd.f32 %v138, %v883
  %v885 = vpop.f32.mrf.mxu0
  %886 = vmatprep.mubr.f32.mxu0 0.0
  %887 = vmatmul.mubr.f32.gmra.mxu0 %v349
  %v888 = vpop.f32.mrf.mxu0
  %v889 = vadd.f32 %v138, %v888
  %v890 = vpop.f32.mrf.mxu0
  %891 = vmatprep.mubr.f32.mxu0 0.0
  %892 = vmatmul.mubr.f32.gmra.mxu0 %v352
  %v893 = vpop.f32.mrf.mxu0
  %v894 = vadd.f32 %v138, %v893
  %v895 = vpop.f32.mrf.mxu0
  %896 = vmatprep.mubr.f32.mxu0 0.0
  %897 = vmatmul.mubr.f32.gmra.mxu0 %v355
  %v898 = vpop.f32.mrf.mxu0
  %v899 = vadd.f32 %v138, %v898
  %v900 = vpop.f32.mrf.mxu0
  %901 = vmatprep.mubr.f32.mxu0 0.0
  %902 = vmatmul.mubr.f32.gmra.mxu0 %v358
  %v903 = vpop.f32.mrf.mxu0
  %v904 = vadd.f32 %v138, %v903
  %v905 = vpop.f32.mrf.mxu0
  %906 = vmatprep.mubr.f32.mxu0 0.0
  %907 = vmatmul.mubr.f32.gmra.mxu0 %v361
  %v908 = vpop.f32.mrf.mxu0
  %v909 = vadd.f32 %v138, %v908
  %v910 = vpop.f32.mrf.mxu0
  %911 = vmatprep.mubr.f32.mxu0 0.0
  %912 = vmatmul.mubr.f32.gmra.mxu0 %v364
  %v913 = vpop.f32.mrf.mxu0
  %v914 = vadd.f32 %v138, %v913
  %v915 = vpop.f32.mrf.mxu0
  %916 = vmatprep.mubr.f32.mxu0 0.0
  %917 = vmatmul.mubr.f32.gmra.mxu0 %v367
  %v918 = vpop.f32.mrf.mxu0
  %v919 = vadd.f32 %v138, %v918
  %v920 = vpop.f32.mrf.mxu0
  %921 = vmatprep.mubr.f32.mxu0 0.0
  %922 = vmatmul.mubr.f32.gmra.mxu0 %v370
  %v923 = vpop.f32.mrf.mxu0
  %v924 = vadd.f32 %v138, %v923
  %v925 = vpop.f32.mrf.mxu0
  %926 = vmatprep.mubr.f32.mxu0 0.0
  %927 = vmatmul.mubr.f32.gmra.mxu0 %v373
  %v928 = vpop.f32.mrf.mxu0
  %v929 = vadd.f32 %v138, %v928
  %v930 = vpop.f32.mrf.mxu0
  %931 = vmatprep.mubr.f32.mxu0 0.0
  %932 = vmatmul.mubr.f32.gmra.mxu0 %v376
  %v933 = vpop.f32.mrf.mxu0
  %v934 = vadd.f32 %v138, %v933
  %v935 = vpop.f32.mrf.mxu0
  %936 = vmatprep.mubr.f32.mxu0 0.0
  %937 = vmatmul.mubr.f32.gmra.mxu0 %v379
  %v938 = vpop.f32.mrf.mxu0
  %v939 = vadd.f32 %v138, %v938
  %v940 = vpop.f32.mrf.mxu0
  %941 = vmatprep.mubr.f32.mxu0 0.0
  %942 = vmatmul.mubr.f32.gmra.mxu0 %v382
  %v943 = vpop.f32.mrf.mxu0
  %v944 = vadd.f32 %v138, %v943
  %v945 = vpop.f32.mrf.mxu0
  %946 = vmatprep.mubr.f32.mxu0 0.0
  %947 = vmatmul.mubr.f32.gmra.mxu0 %v385
  %v948 = vpop.f32.mrf.mxu0
  %v949 = vadd.f32 %v138, %v948
  %v950 = vpop.f32.mrf.mxu0
  %951 = vmatprep.mubr.f32.mxu0 0.0
  %952 = vmatmul.mubr.f32.gmra.mxu0 %v388
  %v953 = vpop.f32.mrf.mxu0
  %v954 = vadd.f32 %v138, %v953
  %v955 = vpop.f32.mrf.mxu0
  %956 = vmatprep.mubr.f32.mxu0 0.0
  %957 = vmatmul.mubr.f32.gmra.mxu0 %v391
  %v958 = vpop.f32.mrf.mxu0
  %v959 = vadd.f32 %v138, %v958
  %v960 = vpop.f32.mrf.mxu0
  %961 = vmatprep.mubr.f32.mxu0 0.0
  %962 = vmatmul.mubr.f32.gmra.mxu0 %v394
  %v963 = vpop.f32.mrf.mxu0
  %v964 = vadd.f32 %v138, %v963
  %v965 = vpop.f32.mrf.mxu0
  %966 = vmatprep.mubr.f32.mxu0 0.0
  %967 = vmatmul.mubr.f32.gmra.mxu0 %v397
  %v968 = vpop.f32.mrf.mxu0
  %v969 = vadd.f32 %v138, %v968
  %v970 = vpop.f32.mrf.mxu0
  %971 = vmatprep.mubr.f32.mxu0 0.0
  %972 = vmatmul.mubr.f32.gmra.mxu0 %v400
  %v973 = vpop.f32.mrf.mxu0
  %v974 = vadd.f32 %v138, %v973
  %v975 = vpop.f32.mrf.mxu0
  %976 = vmatprep.mubr.f32.mxu0 0.0
  %977 = vmatmul.mubr.f32.gmra.mxu0 %v403
  %v978 = vpop.f32.mrf.mxu0
  %v979 = vadd.f32 %v138, %v978
  %v980 = vpop.f32.mrf.mxu0
  %981 = vmatprep.mubr.f32.mxu0 0.0
  %982 = vmatmul.mubr.f32.gmra.mxu0 %v406
  %v983 = vpop.f32.mrf.mxu0
  %v984 = vadd.f32 %v138, %v983
  %v985 = vpop.f32.mrf.mxu0
  %986 = vmatprep.mubr.f32.mxu0 0.0
  %987 = vmatmul.mubr.f32.gmra.mxu0 %v409
  %v988 = vpop.f32.mrf.mxu0
  %v989 = vadd.f32 %v138, %v988
  %v990 = vpop.f32.mrf.mxu0
  %991 = vmatprep.mubr.f32.mxu0 0.0
  %992 = vmatmul.mubr.f32.gmra.mxu0 %v412
  %v993 = vpop.f32.mrf.mxu0
  %v994 = vadd.f32 %v138, %v993
  %v995 = vpop.f32.mrf.mxu0
  %996 = vmatprep.mubr.f32.mxu0 0.0
  %997 = vmatmul.mubr.f32.gmra.mxu0 %v415
  %v998 = vpop.f32.mrf.mxu0
  %v999 = vadd.f32 %v138, %v998
  %v1000 = vpop.f32.mrf.mxu0
  %1001 = vmatprep.mubr.f32.mxu0 0.0
  %1002 = vmatmul.mubr.f32.gmra.mxu0 %v418
  %v1003 = vpop.f32.mrf.mxu0
  %v1004 = vadd.f32 %v138, %v1003
  %v1005 = vpop.f32.mrf.mxu0
  %1006 = vmatprep.mubr.f32.mxu0 0.0
  %1007 = vmatmul.mubr.f32.gmra.mxu0 %v421
  %v1008 = vpop.f32.mrf.mxu0
  %v1009 = vadd.f32 %v138, %v1008
  %v1010 = vpop.f32.mrf.mxu0
  %1011 = vmatprep.mubr.f32.mxu0 0.0
  %1012 = vmatmul.mubr.f32.gmra.mxu0 %v424
  %v1013 = vpop.f32.mrf.mxu0
  %v1014 = vadd.f32 %v138, %v1013
  %v1015 = vpop.f32.mrf.mxu0
  %1016 = vmatprep.mubr.f32.mxu0 0.0
  %1017 = vmatmul.mubr.f32.gmra.mxu0 %v427
  %v1018 = vpop.f32.mrf.mxu0
  %v1019 = vadd.f32 %v138, %v1018
  %v1020 = vpop.f32.mrf.mxu0
  %1021 = vmatprep.mubr.f32.mxu0 0.0
  %1022 = vmatmul.mubr.f32.gmra.mxu0 %v430
  %v1023 = vpop.f32.mrf.mxu0
  %v1024 = vadd.f32 %v138, %v1023
  %v1025 = vpop.f32.mrf.mxu0
  %1026 = vmatprep.mubr.f32.mxu0 0.0
  %1027 = vmatmul.mubr.f32.gmra.mxu0 %v433
  %v1028 = vpop.f32.mrf.mxu0
  %v1029 = vadd.f32 %v138, %v1028
  %v1030 = vpop.f32.mrf.mxu0
  %1031 = vmatprep.mubr.f32.mxu0 0.0
  %1032 = vmatmul.mubr.f32.gmra.mxu0 %v436
  %v1033 = vpop.f32.mrf.mxu0
  %v1034 = vadd.f32 %v138, %v1033
  %v1035 = vpop.f32.mrf.mxu0
  %1036 = vmatprep.mubr.f32.mxu0 0.0
  %1037 = vmatmul.mubr.f32.gmra.mxu0 %v439
  %v1038 = vpop.f32.mrf.mxu0
  %v1039 = vadd.f32 %v138, %v1038
  %v1040 = vpop.f32.mrf.mxu0
  %1041 = vmatprep.mubr.f32.mxu0 0.0
  %1042 = vmatmul.mubr.f32.gmra.mxu0 %v442
  %v1043 = vpop.f32.mrf.mxu0
  %v1044 = vadd.f32 %v138, %v1043
  %v1045 = vpop.f32.mrf.mxu0
  %1046 = vmatprep.mubr.f32.mxu0 0.0
  %1047 = vmatmul.mubr.f32.gmra.mxu0 %v445
  %v1048 = vpop.f32.mrf.mxu0
  %v1049 = vadd.f32 %v138, %v1048
  %v1050 = vpop.f32.mrf.mxu0
  %1051 = vmatprep.mubr.f32.mxu0 0.0
  %1052 = vmatmul.mubr.f32.gmra.mxu0 %v448
  %v1053 = vpop.f32.mrf.mxu0
  %v1054 = vadd.f32 %v138, %v1053
  %v1055 = vpop.f32.mrf.mxu0
  %1056 = vmatprep.mubr.f32.mxu0 0.0
  %1057 = vmatmul.mubr.f32.gmra.mxu0 %v451
  %v1058 = vpop.f32.mrf.mxu0
  %v1059 = vadd.f32 %v138, %v1058
  %v1060 = vpop.f32.mrf.mxu0
  %1061 = vmatprep.mubr.f32.mxu0 0.0
  %1062 = vmatmul.mubr.f32.gmra.mxu0 %v454
  %v1063 = vpop.f32.mrf.mxu0
  %v1064 = vadd.f32 %v138, %v1063
  %v1065 = vpop.f32.mrf.mxu0
  %1066 = vmatprep.mubr.f32.mxu0 0.0
  %1067 = vmatmul.mubr.f32.gmra.mxu0 %v457
  %v1068 = vpop.f32.mrf.mxu0
  %v1069 = vadd.f32 %v138, %v1068
  %v1070 = vpop.f32.mrf.mxu0
  %1071 = vmatprep.mubr.f32.mxu0 0.0
  %1072 = vmatmul.mubr.f32.gmra.mxu0 %v460
  %v1073 = vpop.f32.mrf.mxu0
  %v1074 = vadd.f32 %v138, %v1073
  %v1075 = vpop.f32.mrf.mxu0
  %1076 = vmatprep.mubr.f32.mxu0 0.0
  %1077 = vmatmul.mubr.f32.gmra.mxu0 %v463
  %v1078 = vpop.f32.mrf.mxu0
  %v1079 = vadd.f32 %v138, %v1078
  %v1080 = vpop.f32.mrf.mxu0
  %1081 = vmatprep.mubr.f32.mxu0 0.0
  %1082 = vmatmul.mubr.f32.gmra.mxu0 %v466
  %v1083 = vpop.f32.mrf.mxu0
  %v1084 = vadd.f32 %v138, %v1083
  %v1085 = vpop.f32.mrf.mxu0
  %1086 = vmatprep.mubr.f32.mxu0 0.0
  %1087 = vmatmul.mubr.f32.gmra.mxu0 %v469
  %v1088 = vpop.f32.mrf.mxu0
  %v1089 = vadd.f32 %v138, %v1088
  %v1090 = vpop.f32.mrf.mxu0
  %1091 = vmatprep.mubr.f32.mxu0 0.0
  %1092 = vmatmul.mubr.f32.gmra.mxu0 %v472
  %v1093 = vpop.f32.mrf.mxu0
  %v1094 = vadd.f32 %v138, %v1093
  %v1095 = vpop.f32.mrf.mxu0
  %1096 = vmatprep.mubr.f32.mxu0 0.0
  %1097 = vmatmul.mubr.f32.gmra.mxu0 %v475
  %v1098 = vpop.f32.mrf.mxu0
  %v1099 = vadd.f32 %v138, %v1098
  %v1100 = vpop.f32.mrf.mxu0
  %1101 = vdwg.mxu0
  %vm1102 = vcmp.gt.f32.partialorder %v544, 0.0
  %vm1103 = vcmp.gt.f32.partialorder %v549, 0.0
  %vm1104 = vcmp.gt.f32.partialorder %v554, 0.0
  %vm1105 = vcmp.gt.f32.partialorder %v559, 0.0
  %vm1106 = vcmp.gt.f32.partialorder %v564, 0.0
  %vm1107 = vcmp.gt.f32.partialorder %v569, 0.0
  %vm1108 = vcmp.gt.f32.partialorder %v574, 0.0
  %vm1109 = vcmp.gt.f32.partialorder %v579, 0.0
  %vm1110 = vcmp.gt.f32.partialorder %v584, 0.0
  %vm1111 = vcmp.gt.f32.partialorder %v589, 0.0
  %vm1112 = vcmp.gt.f32.partialorder %v594, 0.0
  %vm1113 = vcmp.gt.f32.partialorder %v599, 0.0
  %vm1114 = vcmp.gt.f32.partialorder %v604, 0.0
  %vm1115 = vcmp.gt.f32.partialorder %v609, 0.0
  %vm1116 = vcmp.gt.f32.partialorder %v614, 0.0
  %vm1117 = vcmp.gt.f32.partialorder %v619, 0.0
  %vm1118 = vcmp.gt.f32.partialorder %v624, 0.0
  %vm1119 = vcmp.gt.f32.partialorder %v629, 0.0
  %vm1120 = vcmp.gt.f32.partialorder %v634, 0.0
  %vm1121 = vcmp.gt.f32.partialorder %v639, 0.0
  %vm1122 = vcmp.gt.f32.partialorder %v644, 0.0
  %vm1123 = vcmp.gt.f32.partialorder %v649, 0.0
  %vm1124 = vcmp.gt.f32.partialorder %v654, 0.0
  %vm1125 = vcmp.gt.f32.partialorder %v659, 0.0
  %vm1126 = vcmp.gt.f32.partialorder %v664, 0.0
  %vm1127 = vcmp.gt.f32.partialorder %v669, 0.0
  %vm1128 = vcmp.gt.f32.partialorder %v674, 0.0
  %vm1129 = vcmp.gt.f32.partialorder %v679, 0.0
  %vm1130 = vcmp.gt.f32.partialorder %v684, 0.0
  %vm1131 = vcmp.gt.f32.partialorder %v689, 0.0
  %vm1132 = vcmp.gt.f32.partialorder %v694, 0.0
  %vm1133 = vcmp.gt.f32.partialorder %v699, 0.0
  %vm1134 = vcmp.gt.f32.partialorder %v704, 0.0
  %vm1135 = vcmp.gt.f32.partialorder %v709, 0.0
  %vm1136 = vcmp.gt.f32.partialorder %v714, 0.0
  %vm1137 = vcmp.gt.f32.partialorder %v719, 0.0
  %vm1138 = vcmp.gt.f32.partialorder %v724, 0.0
  %vm1139 = vcmp.gt.f32.partialorder %v729, 0.0
  %vm1140 = vcmp.gt.f32.partialorder %v734, 0.0
  %vm1141 = vcmp.gt.f32.partialorder %v739, 0.0
  %vm1142 = vcmp.gt.f32.partialorder %v744, 0.0
  %vm1143 = vcmp.gt.f32.partialorder %v749, 0.0
  %vm1144 = vcmp.gt.f32.partialorder %v754, 0.0
  %vm1145 = vcmp.gt.f32.partialorder %v759, 0.0
  %vm1146 = vcmp.gt.f32.partialorder %v764, 0.0
  %vm1147 = vcmp.gt.f32.partialorder %v769, 0.0
  %vm1148 = vcmp.gt.f32.partialorder %v774, 0.0
  %vm1149 = vcmp.gt.f32.partialorder %v779, 0.0
  %vm1150 = vcmp.gt.f32.partialorder %v784, 0.0
  %vm1151 = vcmp.gt.f32.partialorder %v789, 0.0
  %vm1152 = vcmp.gt.f32.partialorder %v794, 0.0
  %vm1153 = vcmp.gt.f32.partialorder %v799, 0.0
  %vm1154 = vcmp.gt.f32.partialorder %v804, 0.0
  %vm1155 = vcmp.gt.f32.partialorder %v809, 0.0
  %vm1156 = vcmp.gt.f32.partialorder %v814, 0.0
  %vm1157 = vcmp.gt.f32.partialorder %v819, 0.0
  %vm1158 = vcmp.gt.f32.partialorder %v824, 0.0
  %vm1159 = vcmp.gt.f32.partialorder %v829, 0.0
  %vm1160 = vcmp.gt.f32.partialorder %v834, 0.0
  %vm1161 = vcmp.gt.f32.partialorder %v839, 0.0
  %vm1162 = vcmp.gt.f32.partialorder %v844, 0.0
  %vm1163 = vcmp.gt.f32.partialorder %v849, 0.0
  %vm1164 = vcmp.gt.f32.partialorder %v854, 0.0
  %vm1165 = vcmp.gt.f32.partialorder %v859, 0.0
  %vm1166 = vcmp.gt.f32.partialorder %v864, 0.0
  %vm1167 = vcmp.gt.f32.partialorder %v869, 0.0
  %vm1168 = vcmp.gt.f32.partialorder %v874, 0.0
  %vm1169 = vcmp.gt.f32.partialorder %v879, 0.0
  %vm1170 = vcmp.gt.f32.partialorder %v884, 0.0
  %vm1171 = vcmp.gt.f32.partialorder %v889, 0.0
  %vm1172 = vcmp.gt.f32.partialorder %v894, 0.0
  %vm1173 = vcmp.gt.f32.partialorder %v899, 0.0
  %vm1174 = vcmp.gt.f32.partialorder %v904, 0.0
  %vm1175 = vcmp.gt.f32.partialorder %v909, 0.0
  %vm1176 = vcmp.gt.f32.partialorder %v914, 0.0
  %vm1177 = vcmp.gt.f32.partialorder %v919, 0.0
  %vm1178 = vcmp.gt.f32.partialorder %v924, 0.0
  %vm1179 = vcmp.gt.f32.partialorder %v929, 0.0
  %vm1180 = vcmp.gt.f32.partialorder %v934, 0.0
  %vm1181 = vcmp.gt.f32.partialorder %v939, 0.0
  %vm1182 = vcmp.gt.f32.partialorder %v944, 0.0
  %vm1183 = vcmp.gt.f32.partialorder %v949, 0.0
  %vm1184 = vcmp.gt.f32.partialorder %v954, 0.0
  %vm1185 = vcmp.gt.f32.partialorder %v959, 0.0
  %vm1186 = vcmp.gt.f32.partialorder %v964, 0.0
  %vm1187 = vcmp.gt.f32.partialorder %v969, 0.0
  %vm1188 = vcmp.gt.f32.partialorder %v974, 0.0
  %vm1189 = vcmp.gt.f32.partialorder %v979, 0.0
  %vm1190 = vcmp.gt.f32.partialorder %v984, 0.0
  %vm1191 = vcmp.gt.f32.partialorder %v989, 0.0
  %vm1192 = vcmp.gt.f32.partialorder %v994, 0.0
  %vm1193 = vcmp.gt.f32.partialorder %v999, 0.0
  %vm1194 = vcmp.gt.f32.partialorder %v1004, 0.0
  %vm1195 = vcmp.gt.f32.partialorder %v1009, 0.0
  %vm1196 = vcmp.gt.f32.partialorder %v1014, 0.0
  %vm1197 = vcmp.gt.f32.partialorder %v1019, 0.0
  %vm1198 = vcmp.gt.f32.partialorder %v1024, 0.0
  %vm1199 = vcmp.gt.f32.partialorder %v1029, 0.0
  %vm1200 = vcmp.gt.f32.partialorder %v1034, 0.0
  %vm1201 = vcmp.gt.f32.partialorder %v1039, 0.0
  %vm1202 = vcmp.gt.f32.partialorder %v1044, 0.0
  %vm1203 = vcmp.gt.f32.partialorder %v1049, 0.0
  %vm1204 = vcmp.gt.f32.partialorder %v1054, 0.0
  %vm1205 = vcmp.gt.f32.partialorder %v1059, 0.0
  %vm1206 = vcmp.gt.f32.partialorder %v1064, 0.0
  %vm1207 = vcmp.gt.f32.partialorder %v1069, 0.0
  %vm1208 = vcmp.gt.f32.partialorder %v1074, 0.0
  %vm1209 = vcmp.gt.f32.partialorder %v1079, 0.0
  %vm1210 = vcmp.gt.f32.partialorder %v1084, 0.0
  %vm1211 = vcmp.gt.f32.partialorder %v1089, 0.0
  %vm1212 = vcmp.gt.f32.partialorder %v1094, 0.0
  %vm1213 = vcmp.gt.f32.partialorder %v1099, 0.0
  %v1214 = vld [vmem:[%s3] sm:$0x1]
  %v1216 = vlaneseq
  %v1217 = vshrl.u32 %v1216, 7
  %v1218 = vsub.s32 0, %v1217
  %v1219 = vrot.slane %v1214, %v1218
  %v1221 = vmul.f32 %v1219, %v544
  %v1222 = vmul.f32 %v1219, %v549
  %v1223 = vmul.f32 %v1219, %v554
  %v1224 = vmul.f32 %v1219, %v559
  %v1225 = vmul.f32 %v1219, %v564
  %v1226 = vmul.f32 %v1219, %v569
  %v1227 = vmul.f32 %v1219, %v574
  %v1228 = vmul.f32 %v1219, %v579
  %v1229 = vmul.f32 %v1219, %v584
  %v1230 = vmul.f32 %v1219, %v589
  %v1231 = vmul.f32 %v1219, %v594
  %v1232 = vmul.f32 %v1219, %v599
  %v1233 = vmul.f32 %v1219, %v604
  %v1234 = vmul.f32 %v1219, %v609
  %v1235 = vmul.f32 %v1219, %v614
  %v1236 = vmul.f32 %v1219, %v619
  %v1237 = vmul.f32 %v1219, %v624
  %v1238 = vmul.f32 %v1219, %v629
  %v1239 = vmul.f32 %v1219, %v634
  %v1240 = vmul.f32 %v1219, %v639
  %v1241 = vmul.f32 %v1219, %v644
  %v1242 = vmul.f32 %v1219, %v649
  %v1243 = vmul.f32 %v1219, %v654
  %v1244 = vmul.f32 %v1219, %v659
  %v1245 = vmul.f32 %v1219, %v664
  %v1246 = vmul.f32 %v1219, %v669
  %v1247 = vmul.f32 %v1219, %v674
  %v1248 = vmul.f32 %v1219, %v679
  %v1249 = vmul.f32 %v1219, %v684
  %v1250 = vmul.f32 %v1219, %v689
  %v1251 = vmul.f32 %v1219, %v694
  %v1252 = vmul.f32 %v1219, %v699
  %v1253 = vmul.f32 %v1219, %v704
  %v1254 = vmul.f32 %v1219, %v709
  %v1255 = vmul.f32 %v1219, %v714
  %v1256 = vmul.f32 %v1219, %v719
  %v1257 = vmul.f32 %v1219, %v724
  %v1258 = vmul.f32 %v1219, %v729
  %v1259 = vmul.f32 %v1219, %v734
  %v1260 = vmul.f32 %v1219, %v739
  %v1261 = vmul.f32 %v1219, %v744
  %v1262 = vmul.f32 %v1219, %v749
  %v1263 = vmul.f32 %v1219, %v754
  %v1264 = vmul.f32 %v1219, %v759
  %v1265 = vmul.f32 %v1219, %v764
  %v1266 = vmul.f32 %v1219, %v769
  %v1267 = vmul.f32 %v1219, %v774
  %v1268 = vmul.f32 %v1219, %v779
  %v1269 = vmul.f32 %v1219, %v784
  %v1270 = vmul.f32 %v1219, %v789
  %v1271 = vmul.f32 %v1219, %v794
  %v1272 = vmul.f32 %v1219, %v799
  %v1273 = vmul.f32 %v1219, %v804
  %v1274 = vmul.f32 %v1219, %v809
  %v1275 = vmul.f32 %v1219, %v814
  %v1276 = vmul.f32 %v1219, %v819
  %v1277 = vmul.f32 %v1219, %v824
  %v1278 = vmul.f32 %v1219, %v829
  %v1279 = vmul.f32 %v1219, %v834
  %v1280 = vmul.f32 %v1219, %v839
  %v1281 = vmul.f32 %v1219, %v844
  %v1282 = vmul.f32 %v1219, %v849
  %v1283 = vmul.f32 %v1219, %v854
  %v1284 = vmul.f32 %v1219, %v859
  %v1285 = vmul.f32 %v1219, %v864
  %v1286 = vmul.f32 %v1219, %v869
  %v1287 = vmul.f32 %v1219, %v874
  %v1288 = vmul.f32 %v1219, %v879
  %v1289 = vmul.f32 %v1219, %v884
  %v1290 = vmul.f32 %v1219, %v889
  %v1291 = vmul.f32 %v1219, %v894
  %v1292 = vmul.f32 %v1219, %v899
  %v1293 = vmul.f32 %v1219, %v904
  %v1294 = vmul.f32 %v1219, %v909
  %v1295 = vmul.f32 %v1219, %v914
  %v1296 = vmul.f32 %v1219, %v919
  %v1297 = vmul.f32 %v1219, %v924
  %v1298 = vmul.f32 %v1219, %v929
  %v1299 = vmul.f32 %v1219, %v934
  %v1300 = vmul.f32 %v1219, %v939
  %v1301 = vmul.f32 %v1219, %v944
  %v1302 = vmul.f32 %v1219, %v949
  %v1303 = vmul.f32 %v1219, %v954
  %v1304 = vmul.f32 %v1219, %v959
  %v1305 = vmul.f32 %v1219, %v964
  %v1306 = vmul.f32 %v1219, %v969
  %v1307 = vmul.f32 %v1219, %v974
  %v1308 = vmul.f32 %v1219, %v979
  %v1309 = vmul.f32 %v1219, %v984
  %v1310 = vmul.f32 %v1219, %v989
  %v1311 = vmul.f32 %v1219, %v994
  %v1312 = vmul.f32 %v1219, %v999
  %v1313 = vmul.f32 %v1219, %v1004
  %v1314 = vmul.f32 %v1219, %v1009
  %v1315 = vmul.f32 %v1219, %v1014
  %v1316 = vmul.f32 %v1219, %v1019
  %v1317 = vmul.f32 %v1219, %v1024
  %v1318 = vmul.f32 %v1219, %v1029
  %v1319 = vmul.f32 %v1219, %v1034
  %v1320 = vmul.f32 %v1219, %v1039
  %v1321 = vmul.f32 %v1219, %v1044
  %v1322 = vmul.f32 %v1219, %v1049
  %v1323 = vmul.f32 %v1219, %v1054
  %v1324 = vmul.f32 %v1219, %v1059
  %v1325 = vmul.f32 %v1219, %v1064
  %v1326 = vmul.f32 %v1219, %v1069
  %v1327 = vmul.f32 %v1219, %v1074
  %v1328 = vmul.f32 %v1219, %v1079
  %v1329 = vmul.f32 %v1219, %v1084
  %v1330 = vmul.f32 %v1219, %v1089
  %v1331 = vmul.f32 %v1219, %v1094
  %v1332 = vmul.f32 %v1219, %v1099
  %v1333 = vsel %vm1102, %v544, %v1221
  %v1334 = vsel %vm1103, %v549, %v1222
  %v1335 = vsel %vm1104, %v554, %v1223
  %v1336 = vsel %vm1105, %v559, %v1224
  %v1337 = vsel %vm1106, %v564, %v1225
  %v1338 = vsel %vm1107, %v569, %v1226
  %v1339 = vsel %vm1108, %v574, %v1227
  %v1340 = vsel %vm1109, %v579, %v1228
  %v1341 = vsel %vm1110, %v584, %v1229
  %v1342 = vsel %vm1111, %v589, %v1230
  %v1343 = vsel %vm1112, %v594, %v1231
  %v1344 = vsel %vm1113, %v599, %v1232
  %v1345 = vsel %vm1114, %v604, %v1233
  %v1346 = vsel %vm1115, %v609, %v1234
  %v1347 = vsel %vm1116, %v614, %v1235
  %v1348 = vsel %vm1117, %v619, %v1236
  %v1349 = vsel %vm1118, %v624, %v1237
  %v1350 = vsel %vm1119, %v629, %v1238
  %v1351 = vsel %vm1120, %v634, %v1239
  %v1352 = vsel %vm1121, %v639, %v1240
  %v1353 = vsel %vm1122, %v644, %v1241
  %v1354 = vsel %vm1123, %v649, %v1242
  %v1355 = vsel %vm1124, %v654, %v1243
  %v1356 = vsel %vm1125, %v659, %v1244
  %v1357 = vsel %vm1126, %v664, %v1245
  %v1358 = vsel %vm1127, %v669, %v1246
  %v1359 = vsel %vm1128, %v674, %v1247
  %v1360 = vsel %vm1129, %v679, %v1248
  %v1361 = vsel %vm1130, %v684, %v1249
  %v1362 = vsel %vm1131, %v689, %v1250
  %v1363 = vsel %vm1132, %v694, %v1251
  %v1364 = vsel %vm1133, %v699, %v1252
  %v1365 = vsel %vm1134, %v704, %v1253
  %v1366 = vsel %vm1135, %v709, %v1254
  %v1367 = vsel %vm1136, %v714, %v1255
  %v1368 = vsel %vm1137, %v719, %v1256
  %v1369 = vsel %vm1138, %v724, %v1257
  %v1370 = vsel %vm1139, %v729, %v1258
  %v1371 = vsel %vm1140, %v734, %v1259
  %v1372 = vsel %vm1141, %v739, %v1260
  %v1373 = vsel %vm1142, %v744, %v1261
  %v1374 = vsel %vm1143, %v749, %v1262
  %v1375 = vsel %vm1144, %v754, %v1263
  %v1376 = vsel %vm1145, %v759, %v1264
  %v1377 = vsel %vm1146, %v764, %v1265
  %v1378 = vsel %vm1147, %v769, %v1266
  %v1379 = vsel %vm1148, %v774, %v1267
  %v1380 = vsel %vm1149, %v779, %v1268
  %v1381 = vsel %vm1150, %v784, %v1269
  %v1382 = vsel %vm1151, %v789, %v1270
  %v1383 = vsel %vm1152, %v794, %v1271
  %v1384 = vsel %vm1153, %v799, %v1272
  %v1385 = vsel %vm1154, %v804, %v1273
  %v1386 = vsel %vm1155, %v809, %v1274
  %v1387 = vsel %vm1156, %v814, %v1275
  %v1388 = vsel %vm1157, %v819, %v1276
  %v1389 = vsel %vm1158, %v824, %v1277
  %v1390 = vsel %vm1159, %v829, %v1278
  %v1391 = vsel %vm1160, %v834, %v1279
  %v1392 = vsel %vm1161, %v839, %v1280
  %v1393 = vsel %vm1162, %v844, %v1281
  %v1394 = vsel %vm1163, %v849, %v1282
  %v1395 = vsel %vm1164, %v854, %v1283
  %v1396 = vsel %vm1165, %v859, %v1284
  %v1397 = vsel %vm1166, %v864, %v1285
  %v1398 = vsel %vm1167, %v869, %v1286
  %v1399 = vsel %vm1168, %v874, %v1287
  %v1400 = vsel %vm1169, %v879, %v1288
  %v1401 = vsel %vm1170, %v884, %v1289
  %v1402 = vsel %vm1171, %v889, %v1290
  %v1403 = vsel %vm1172, %v894, %v1291
  %v1404 = vsel %vm1173, %v899, %v1292
  %v1405 = vsel %vm1174, %v904, %v1293
  %v1406 = vsel %vm1175, %v909, %v1294
  %v1407 = vsel %vm1176, %v914, %v1295
  %v1408 = vsel %vm1177, %v919, %v1296
  %v1409 = vsel %vm1178, %v924, %v1297
  %v1410 = vsel %vm1179, %v929, %v1298
  %v1411 = vsel %vm1180, %v934, %v1299
  %v1412 = vsel %vm1181, %v939, %v1300
  %v1413 = vsel %vm1182, %v944, %v1301
  %v1414 = vsel %vm1183, %v949, %v1302
  %v1415 = vsel %vm1184, %v954, %v1303
  %v1416 = vsel %vm1185, %v959, %v1304
  %v1417 = vsel %vm1186, %v964, %v1305
  %v1418 = vsel %vm1187, %v969, %v1306
  %v1419 = vsel %vm1188, %v974, %v1307
  %v1420 = vsel %vm1189, %v979, %v1308
  %v1421 = vsel %vm1190, %v984, %v1309
  %v1422 = vsel %vm1191, %v989, %v1310
  %v1423 = vsel %vm1192, %v994, %v1311
  %v1424 = vsel %vm1193, %v999, %v1312
  %v1425 = vsel %vm1194, %v1004, %v1313
  %v1426 = vsel %vm1195, %v1009, %v1314
  %v1427 = vsel %vm1196, %v1014, %v1315
  %v1428 = vsel %vm1197, %v1019, %v1316
  %v1429 = vsel %vm1198, %v1024, %v1317
  %v1430 = vsel %vm1199, %v1029, %v1318
  %v1431 = vsel %vm1200, %v1034, %v1319
  %v1432 = vsel %vm1201, %v1039, %v1320
  %v1433 = vsel %vm1202, %v1044, %v1321
  %v1434 = vsel %vm1203, %v1049, %v1322
  %v1435 = vsel %vm1204, %v1054, %v1323
  %v1436 = vsel %vm1205, %v1059, %v1324
  %v1437 = vsel %vm1206, %v1064, %v1325
  %v1438 = vsel %vm1207, %v1069, %v1326
  %v1439 = vsel %vm1208, %v1074, %v1327
  %v1440 = vsel %vm1209, %v1079, %v1328
  %v1441 = vsel %vm1210, %v1084, %v1329
  %v1442 = vsel %vm1211, %v1089, %v1330
  %v1443 = vsel %vm1212, %v1094, %v1331
  %v1444 = vsel %vm1213, %v1099, %v1332
  %1445 = vst [vmem:[%s4] sm:$0xff] %v1333
  %1446 = vst [vmem:[%s4 + $0x8] sm:$0xff] %v1334
  %1447 = vst [vmem:[%s4 + $0x10] sm:$0xff] %v1335
  %1448 = vst [vmem:[%s4 + $0x18] sm:$0xff] %v1336
  %1449 = vst [vmem:[%s4 + $0x20] sm:$0xff] %v1337
  %1450 = vst [vmem:[%s4 + $0x28] sm:$0xff] %v1338
  %1451 = vst [vmem:[%s4 + $0x30] sm:$0xff] %v1339
  %1452 = vst [vmem:[%s4 + $0x38] sm:$0xff] %v1340
  %1453 = vst [vmem:[%s4 + $0x40] sm:$0xff] %v1341
  %1454 = vst [vmem:[%s4 + $0x48] sm:$0xff] %v1342
  %1455 = vst [vmem:[%s4 + $0x50] sm:$0xff] %v1343
  %1456 = vst [vmem:[%s4 + $0x58] sm:$0xff] %v1344
  %1457 = vst [vmem:[%s4 + $0x60] sm:$0xff] %v1345
  %1458 = vst [vmem:[%s4 + $0x68] sm:$0xff] %v1346
  %1459 = vst [vmem:[%s4 + $0x70] sm:$0xff] %v1347
  %1460 = vst [vmem:[%s4 + $0x78] sm:$0xff] %v1348
  %1461 = vst [vmem:[%s4 + $0x80] sm:$0xff] %v1349
  %1462 = vst [vmem:[%s4 + $0x88] sm:$0xff] %v1350
  %1463 = vst [vmem:[%s4 + $0x90] sm:$0xff] %v1351
  %1464 = vst [vmem:[%s4 + $0x98] sm:$0xff] %v1352
  %1465 = vst [vmem:[%s4 + $0xa0] sm:$0xff] %v1353
  %1466 = vst [vmem:[%s4 + $0xa8] sm:$0xff] %v1354
  %1467 = vst [vmem:[%s4 + $0xb0] sm:$0xff] %v1355
  %1468 = vst [vmem:[%s4 + $0xb8] sm:$0xff] %v1356
  %1469 = vst [vmem:[%s4 + $0xc0] sm:$0xff] %v1357
  %1470 = vst [vmem:[%s4 + $0xc8] sm:$0xff] %v1358
  %1471 = vst [vmem:[%s4 + $0xd0] sm:$0xff] %v1359
  %1472 = vst [vmem:[%s4 + $0xd8] sm:$0xff] %v1360
  %1473 = vst [vmem:[%s4 + $0xe0] sm:$0xff] %v1361
  %1474 = vst [vmem:[%s4 + $0xe8] sm:$0xff] %v1362
  %1475 = vst [vmem:[%s4 + $0xf0] sm:$0xff] %v1363
  %1476 = vst [vmem:[%s4 + $0xf8] sm:$0xff] %v1364
  %1477 = vst [vmem:[%s4 + $0x100] sm:$0xff] %v1365
  %1478 = vst [vmem:[%s4 + $0x108] sm:$0xff] %v1366
  %1479 = vst [vmem:[%s4 + $0x110] sm:$0xff] %v1367
  %1480 = vst [vmem:[%s4 + $0x118] sm:$0xff] %v1368
  %1481 = vst [vmem:[%s4 + $0x120] sm:$0xff] %v1369
  %1482 = vst [vmem:[%s4 + $0x128] sm:$0xff] %v1370
  %1483 = vst [vmem:[%s4 + $0x130] sm:$0xff] %v1371
  %1484 = vst [vmem:[%s4 + $0x138] sm:$0xff] %v1372
  %1485 = vst [vmem:[%s4 + $0x140] sm:$0xff] %v1373
  %1486 = vst [vmem:[%s4 + $0x148] sm:$0xff] %v1374
  %1487 = vst [vmem:[%s4 + $0x150] sm:$0xff] %v1375
  %1488 = vst [vmem:[%s4 + $0x158] sm:$0xff] %v1376
  %1489 = vst [vmem:[%s4 + $0x160] sm:$0xff] %v1377
  %1490 = vst [vmem:[%s4 + $0x168] sm:$0xff] %v1378
  %1491 = vst [vmem:[%s4 + $0x170] sm:$0xff] %v1379
  %1492 = vst [vmem:[%s4 + $0x178] sm:$0xff] %v1380
  %1493 = vst [vmem:[%s4 + $0x180] sm:$0xff] %v1381
  %1494 = vst [vmem:[%s4 + $0x188] sm:$0xff] %v1382
  %1495 = vst [vmem:[%s4 + $0x190] sm:$0xff] %v1383
  %1496 = vst [vmem:[%s4 + $0x198] sm:$0xff] %v1384
  %1497 = vst [vmem:[%s4 + $0x1a0] sm:$0xff] %v1385
  %1498 = vst [vmem:[%s4 + $0x1a8] sm:$0xff] %v1386
  %1499 = vst [vmem:[%s4 + $0x1b0] sm:$0xff] %v1387
  %1500 = vst [vmem:[%s4 + $0x1b8] sm:$0xff] %v1388
  %1501 = vst [vmem:[%s4 + $0x1c0] sm:$0xff] %v1389
  %1502 = vst [vmem:[%s4 + $0x1c8] sm:$0xff] %v1390
  %1503 = vst [vmem:[%s4 + $0x1d0] sm:$0xff] %v1391
  %1504 = vst [vmem:[%s4 + $0x1d8] sm:$0xff] %v1392
  %1505 = vst [vmem:[%s4 + $0x1e0] sm:$0xff] %v1393
  %1506 = vst [vmem:[%s4 + $0x1e8] sm:$0xff] %v1394
  %1507 = vst [vmem:[%s4 + $0x1f0] sm:$0xff] %v1395
  %1508 = vst [vmem:[%s4 + $0x1f8] sm:$0xff] %v1396
  %1509 = vst [vmem:[%s4 + $0x200] sm:$0xff] %v1397
  %1510 = vst [vmem:[%s4 + $0x208] sm:$0xff] %v1398
  %1511 = vst [vmem:[%s4 + $0x210] sm:$0xff] %v1399
  %1512 = vst [vmem:[%s4 + $0x218] sm:$0xff] %v1400
  %1513 = vst [vmem:[%s4 + $0x220] sm:$0xff] %v1401
  %1514 = vst [vmem:[%s4 + $0x228] sm:$0xff] %v1402
  %1515 = vst [vmem:[%s4 + $0x230] sm:$0xff] %v1403
  %1516 = vst [vmem:[%s4 + $0x238] sm:$0xff] %v1404
  %1517 = vst [vmem:[%s4 + $0x240] sm:$0xff] %v1405
  %1518 = vst [vmem:[%s4 + $0x248] sm:$0xff] %v1406
  %1519 = vst [vmem:[%s4 + $0x250] sm:$0xff] %v1407
  %1520 = vst [vmem:[%s4 + $0x258] sm:$0xff] %v1408
  %1521 = vst [vmem:[%s4 + $0x260] sm:$0xff] %v1409
  %1522 = vst [vmem:[%s4 + $0x268] sm:$0xff] %v1410
  %1523 = vst [vmem:[%s4 + $0x270] sm:$0xff] %v1411
  %1524 = vst [vmem:[%s4 + $0x278] sm:$0xff] %v1412
  %1525 = vst [vmem:[%s4 + $0x280] sm:$0xff] %v1413
  %1526 = vst [vmem:[%s4 + $0x288] sm:$0xff] %v1414
  %1527 = vst [vmem:[%s4 + $0x290] sm:$0xff] %v1415
  %1528 = vst [vmem:[%s4 + $0x298] sm:$0xff] %v1416
  %1529 = vst [vmem:[%s4 + $0x2a0] sm:$0xff] %v1417
  %1530 = vst [vmem:[%s4 + $0x2a8] sm:$0xff] %v1418
  %1531 = vst [vmem:[%s4 + $0x2b0] sm:$0xff] %v1419
  %1532 = vst [vmem:[%s4 + $0x2b8] sm:$0xff] %v1420
  %1533 = vst [vmem:[%s4 + $0x2c0] sm:$0xff] %v1421
  %1534 = vst [vmem:[%s4 + $0x2c8] sm:$0xff] %v1422
  %1535 = vst [vmem:[%s4 + $0x2d0] sm:$0xff] %v1423
  %1536 = vst [vmem:[%s4 + $0x2d8] sm:$0xff] %v1424
  %1537 = vst [vmem:[%s4 + $0x2e0] sm:$0xff] %v1425
  %1538 = vst [vmem:[%s4 + $0x2e8] sm:$0xff] %v1426
  %1539 = vst [vmem:[%s4 + $0x2f0] sm:$0xff] %v1427
  %1540 = vst [vmem:[%s4 + $0x2f8] sm:$0xff] %v1428
  %1541 = vst [vmem:[%s4 + $0x300] sm:$0xff] %v1429
  %1542 = vst [vmem:[%s4 + $0x308] sm:$0xff] %v1430
  %1543 = vst [vmem:[%s4 + $0x310] sm:$0xff] %v1431
  %1544 = vst [vmem:[%s4 + $0x318] sm:$0xff] %v1432
  %1545 = vst [vmem:[%s4 + $0x320] sm:$0xff] %v1433
  %1546 = vst [vmem:[%s4 + $0x328] sm:$0xff] %v1434
  %1547 = vst [vmem:[%s4 + $0x330] sm:$0xff] %v1435
  %1548 = vst [vmem:[%s4 + $0x338] sm:$0xff] %v1436
  %1549 = vst [vmem:[%s4 + $0x340] sm:$0xff] %v1437
  %1550 = vst [vmem:[%s4 + $0x348] sm:$0xff] %v1438
  %1551 = vst [vmem:[%s4 + $0x350] sm:$0xff] %v1439
  %1552 = vst [vmem:[%s4 + $0x358] sm:$0xff] %v1440
  %1553 = vst [vmem:[%s4 + $0x360] sm:$0xff] %v1441
  %1554 = vst [vmem:[%s4 + $0x368] sm:$0xff] %v1442
  %1555 = vst [vmem:[%s4 + $0x370] sm:$0xff] %v1443
  %1556 = vst [vmem:[%s4 + $0x378] sm:$0xff] %v1444
  // Predicated region
  $region18: #{up_trans_add.3} parent=0 // pred_check
    _
  $region19: #{up_trans_add.3} parent=0 // pred_check_branch
    %1558 = sbr.rel (0) target = $region21
  $region20: #{up_trans_add.3} parent=0 // pred_region
    _
  $region21: #{up_trans_add.3} parent=0 // pred_fallthru
    _
  // Predicated region
  $region22: #{up_trans_add.3} parent=0 // pred_check
    _
  $region23: #{up_trans_add.3} parent=0 // pred_check_branch
    %1560 = sbr.rel (0) target = $region25
  $region24: #{up_trans_add.3} parent=0 // pred_region
    _
  $region25: #{up_trans_add.3} parent=0 // pred_fallthru
    _

</llo_original>
